<compile_context>
chip_gen: v7x
topology: tpu7x:2x2x1
jax: 0.10.0
libtpu: 0.0.40
codegen_flags: <defaults>
</compile_context>

<pallas_src>
import functools

import jax
import jax.numpy as jnp
from jax.experimental import pallas as pl
from jax.experimental.pallas import tpu as pltpu

EPS = 1e-5


def _ln_trailing2(v, gamma, beta):
    """Two-pass LayerNorm over the trailing (L, C) dims of a (BB, L, C) block."""
    mu = jnp.mean(v, axis=(1, 2), keepdims=True)
    d = v - mu
    var = jnp.mean(d * d, axis=(1, 2), keepdims=True)
    return d * jax.lax.rsqrt(var + EPS) * gamma + beta


def _mixer_kernel(x_ref, xs_ref, tm_w_ref, fm1_wf_ref, fm1_w2_ref,
                  fm2_wxf_ref, fm2_wsf_ref, fm2_w2_ref,
                  rowL_ref, row1_ref, g_out_ref, be_out_ref, o_ref,
                  *, flat_out):
    f32 = jnp.float32
    BB, L, Di = x_ref.shape
    S = xs_ref.shape[-1]
    F, O = fm1_w2_ref.shape
    M = Di + O

    x = x_ref[...]    # (BB, L, Di)
    xs = xs_ref[...]  # (BB, L, S)

    # ---- unpack parameter slabs (static lane slices, once per grid step) ----
    rowL = rowL_ref[...]                              # (L, 1 + 2*M + 2*O)
    c = 0
    tm_b = rowL[:, c:c + 1]; c += 1                   # (L, 1)
    tm_gx = rowL[:, c:c + Di]; c += Di                # (L, Di)
    tm_gs = rowL[:, c:c + O]; c += O                  # (L, O)
    tm_bex = rowL[:, c:c + Di]; c += Di
    tm_bes = rowL[:, c:c + O]; c += O
    fm1_g = rowL[:, c:c + O]; c += O
    fm1_be = rowL[:, c:c + O]; c += O

    row1 = row1_ref[...]                              # (1, 2*(O+F) + 2*O)
    c = 0
    fm1_b1f = row1[:, c:c + O + F]; c += O + F        # fused [projection | fc1] bias
    fm1_b2 = row1[:, c:c + O]; c += O
    fm2_b1f = row1[:, c:c + O + F]; c += O + F
    fm2_b2 = row1[:, c:c + O]; c += O

    # ---- _FeatureMixing on static covariates: row-independent, run as (BB*L, S) ----
    # Projection and fc1 share the LHS -> one fused matmul, split at column O.
    xs2 = xs.reshape(BB * L, S)
    h1 = jnp.dot(xs2, fm1_wf_ref[...], preferred_element_type=f32) + fm1_b1f
    y1 = (h1[:, :O]
          + jnp.dot(jax.nn.relu(h1[:, O:]), fm1_w2_ref[...],
                    preferred_element_type=f32) + fm1_b2)
    xs_mixed = _ln_trailing2(y1.reshape(BB, L, O), fm1_g, fm1_be)      # (BB, L, O)

    # ---- _TimeMixing, applied per feature-column group (no lane concat) ----
    # Supported 3D x 3D batched matmul; broadcast size is bounded by the BB selection.
    tm_w = jnp.broadcast_to(tm_w_ref[...], (BB, L, L))
    t_x = jnp.einsum('btl,bld->btd', tm_w, x, preferred_element_type=f32)
    t_s = jnp.einsum('btl,bld->btd', tm_w, xs_mixed, preferred_element_type=f32)
    z_x = x + jax.nn.relu(t_x + tm_b)                                  # (BB, L, Di)
    z_s = xs_mixed + jax.nn.relu(t_s + tm_b)                           # (BB, L, O)

    # Joint two-pass LayerNorm over the (L, M) trailing dims of [z_x | z_s],
    # without materializing the concat.
    n = jnp.float32(L * M)
    mu = (jnp.sum(z_x, axis=(1, 2), keepdims=True)
          + jnp.sum(z_s, axis=(1, 2), keepdims=True)) / n
    dx = z_x - mu
    ds = z_s - mu
    var = (jnp.sum(dx * dx, axis=(1, 2), keepdims=True)
           + jnp.sum(ds * ds, axis=(1, 2), keepdims=True)) / n
    r = jax.lax.rsqrt(var + EPS)
    xt_x = dx * r * tm_gx + tm_bex                                     # (BB, L, Di)
    xt_s = ds * r * tm_gs + tm_bes                                     # (BB, L, O)

    # ---- _FeatureMixing on [xt_x | xt_s]: K column-split, N-fused [projection | fc1] ----
    h2 = (jnp.dot(xt_x.reshape(BB * L, Di), fm2_wxf_ref[...], preferred_element_type=f32)
          + jnp.dot(xt_s.reshape(BB * L, O), fm2_wsf_ref[...], preferred_element_type=f32)
          + fm2_b1f)
    y2 = (h2[:, :O]
          + jnp.dot(jax.nn.relu(h2[:, O:]), fm2_w2_ref[...],
                    preferred_element_type=f32) + fm2_b2)              # (BB*L, O)

    if flat_out:
        # Lane-dense final LayerNorm + store: one (BB, L*O) slab per step.
        y2f = y2.reshape(BB, L * O)
        mu2 = jnp.mean(y2f, axis=-1, keepdims=True)
        d2 = y2f - mu2
        var2 = jnp.mean(d2 * d2, axis=-1, keepdims=True)
        out = d2 * jax.lax.rsqrt(var2 + EPS) * g_out_ref[...] + be_out_ref[...]
        o_ref[...] = out[None].astype(o_ref.dtype)                     # (1, BB, L*O)
    else:
        out = _ln_trailing2(y2.reshape(BB, L, O), g_out_ref[...], be_out_ref[...])
        o_ref[...] = out.astype(o_ref.dtype)                           # (BB, L, O)


def _choose_block_b(B, L, Di, S, O, F):
    M = Di + O
    # Approximate f32 bytes one sample keeps live inside a grid step (input/output blocks,
    # fused-hidden activations, time-mix temporaries, and the broadcast (L, L) weight copy).
    per_sample = 4 * (L * (Di + S + O + 2 * (O + F) + 4 * M) + L * L)
    target = 4 * 1024 * 1024          # ~4 MiB/step: amortizes the ~0.35us per-step overhead,
                                      # fits v7x's 64 MiB VMEM with double-buffering + params.
    bb = max(1, min(B, target // max(per_sample, 1)))
    # Keep >= 2 grid steps whenever B allows, so the "parallel" batch axis can be sharded
    # across both TensorCores on dual-TC chips (v7x); at most one extra step elsewhere.
    if B >= 2:
        bb = min(bb, (B + 1) // 2)
    return bb


def conditional_mixer_layer(x, x_static, params, output_dim, block_b=None):
    """x: (B, L, input_dim), x_static: (B, L, static_cov_dim) -> (B, L, output_dim)."""
    f32 = jnp.float32
    x = x.astype(f32)
    x_static = x_static.astype(f32)
    B, L, Di = x.shape
    S = x_static.shape[-1]
    O = int(output_dim)
    M = Di + O

    (fm1_wp, fm1_bp, fm1_w1, fm1_b1, fm1_w2, fm1_b2, fm1_g, fm1_be,
     tm_w, tm_b, tm_g, tm_be,
     fm2_wp, fm2_bp, fm2_w1, fm2_b1, fm2_w2, fm2_b2, fm2_g, fm2_be) = [
         p.astype(f32) for p in params]
    F = fm1_w1.shape[1]

    # --- parameter preprocessing (pure JAX, outside the kernel, done once) ---
    # Fuse matmuls sharing an LHS along N: [projection | fc1].
    fm1_wf = jnp.concatenate([fm1_wp, fm1_w1], axis=1)                  # (S, O+F)
    # fm2 consumes the concatenated [x | xs_mixed] axis: column-split at Di (so the kernel
    # never lane-concats at a non-aligned offset), then N-fuse each group.
    fm2_wxf = jnp.concatenate([fm2_wp[:Di], fm2_w1[:Di]], axis=1)       # (Di, O+F)
    fm2_wsf = jnp.concatenate([fm2_wp[Di:], fm2_w1[Di:]], axis=1)       # (O, O+F)
    # Consolidate the tiny affine / bias params into two slabs (fewer BlockSpec pipelines).
    rowL = jnp.concatenate([tm_b, tm_g[:, :Di], tm_g[:, Di:],
                            tm_be[:, :Di], tm_be[:, Di:], fm1_g, fm1_be], axis=1)
    row1 = jnp.concatenate([fm1_bp, fm1_b1, fm1_b2, fm2_bp, fm2_b1, fm2_b2], axis=1)

    # --- batch blocking: pad B so awkward batch sizes keep the large-block path ---
    BB = int(block_b) if block_b is not None else _choose_block_b(B, L, Di, S, O, F)
    BB = max(1, min(BB, B))
    steps = -(-B // BB)          # cdiv
    Bp = steps * BB
    if Bp != B:
        pad = ((0, Bp - B), (0, 0), (0, 0))
        x = jnp.pad(x, pad)
        x_static = jnp.pad(x_static, pad)

    flops = 2 * Bp * L * (S * (O + F) + F * O + L * M
                          + Di * (O + F) + O * (O + F) + F * O)
    param_bytes = 4 * int(fm1_wf.size + fm1_w2.size + fm2_wxf.size + fm2_wsf.size
                          + fm2_w2.size + tm_w.size + rowL.size + row1.size + 2 * L * O)
    cost = pl.CostEstimate(flops=int(flops), transcendentals=0,
                           bytes_accessed=int(4 * Bp * L * (Di + S + O) + param_bytes))
    cparams = pltpu.CompilerParams(
        dimension_semantics=("parallel",),
        vmem_limit_bytes=48 * 1024 * 1024)  # above the 16/32 MiB defaults, below v7x's 64 MiB

    def _run(flat_out):
        if flat_out:
            g_out = fm2_g.reshape(1, L * O)
            be_out = fm2_be.reshape(1, L * O)
            out_shape = jax.ShapeDtypeStruct((steps, BB, L * O), f32)
            out_spec = pl.BlockSpec((1, BB, L * O), lambda b: (b, 0, 0))
        else:
            g_out, be_out = fm2_g, fm2_be
            out_shape = jax.ShapeDtypeStruct((Bp, L, O), f32)
            out_spec = pl.BlockSpec((BB, L, O), lambda b: (b, 0, 0))

        kparams = (tm_w, fm1_wf, fm1_w2, fm2_wxf, fm2_wsf, fm2_w2,
                   rowL, row1, g_out, be_out)
        in_specs = [pl.BlockSpec((BB, L, Di), lambda b: (b, 0, 0)),
                    pl.BlockSpec((BB, L, S), lambda b: (b, 0, 0))]
        for p in kparams:  # whole parameter array resident every step
            in_specs.append(pl.BlockSpec(p.shape, lambda b, nd=p.ndim: (0,) * nd))

        out = pl.pallas_call(
            functools.partial(_mixer_kernel, flat_out=flat_out),
            out_shape=out_shape,
            grid=(steps,),
            in_specs=in_specs,
            out_specs=out_spec,
            compiler_params=cparams,
            cost_estimate=cost,
        )(x, x_static, *kparams)
        if flat_out:
            out = out.reshape(Bp, L, O)
        return out[:B]

    try:
        # Preferred: lane-dense (BB, L*O) output layout (wider stores, cheaper final LN).
        return _run(flat_out=True)
    except Exception:
        # Fallback (identical math) in case the in-kernel sublane->lane reshape is not
        # supported by the local Mosaic version.  (Only effective in eager execution.)
        return _run(flat_out=False)


# ---------------- pure-JAX reference (for correctness check) ----------------
def _reference(x, x_static, params):
    (fm1_wp, fm1_bp, fm1_w1, fm1_b1, fm1_w2, fm1_b2, fm1_g, fm1_be,
     tm_w, tm_b, tm_g, tm_be,
     fm2_wp, fm2_bp, fm2_w1, fm2_b1, fm2_w2, fm2_b2, fm2_g, fm2_be) = params

    def ln(v, g, b):
        mu = jnp.mean(v, axis=(-2, -1), keepdims=True)
        var = jnp.mean((v - mu) ** 2, axis=(-2, -1), keepdims=True)
        return (v - mu) / jnp.sqrt(var + EPS) * g + b

    # feature mixing of static covariates
    xp = x_static @ fm1_wp + fm1_bp
    h = jax.nn.relu(x_static @ fm1_w1 + fm1_b1) @ fm1_w2 + fm1_b2
    xs_mixed = ln(xp + h, fm1_g, fm1_be)
    xc = jnp.concatenate([x, xs_mixed], axis=-1)
    # time mixing: permute(0,2,1) -> Linear(L,L) -> relu -> permute back
    t = jnp.transpose(xc, (0, 2, 1)) @ tm_w.T + tm_b[:, 0]
    t = jax.nn.relu(jnp.transpose(t, (0, 2, 1)))
    xt = ln(xc + t, tm_g, tm_be)
    # feature mixing
    xp2 = xt @ fm2_wp + fm2_bp
    h2 = jax.nn.relu(xt @ fm2_w1 + fm2_b1) @ fm2_w2 + fm2_b2
    return ln(xp2 + h2, fm2_g, fm2_be)


def _init_params(key, L, Di, S, O, F):
    M = Di + O  # mixing_input = input_dim + output_dim (static_cov_dim != 0)
    keys = iter(jax.random.split(key, 32))

    def lin(kin, kout, fan_in):
        s = 1.0 / jnp.sqrt(jnp.float32(fan_in))
        w = jax.random.uniform(next(keys), (kin, kout), jnp.float32, -s, s)
        b = jax.random.uniform(next(keys), (1, kout), jnp.float32, -s, s)
        return w, b

    # feature_mixing_static: S -> O (projection present since S != O), ff=F
    fm1_wp, fm1_bp = lin(S, O, S)
    fm1_w1, fm1_b1 = lin(S, F, S)
    fm1_w2, fm1_b2 = lin(F, O, F)
    fm1_g = jnp.ones((L, O), jnp.float32) + 0.05 * jax.random.normal(next(keys), (L, O))
    fm1_be = 0.05 * jax.random.normal(next(keys), (L, O))

    # time_mixing: Linear(L, L); stored as (out, in) as in PyTorch.
    s = 1.0 / jnp.sqrt(jnp.float32(L))
    tm_w = jax.random.uniform(next(keys), (L, L), jnp.float32, -s, s)
    tm_b = jax.random.uniform(next(keys), (L, 1), jnp.float32, -s, s)
    tm_g = jnp.ones((L, M), jnp.float32) + 0.05 * jax.random.normal(next(keys), (L, M))
    tm_be = 0.05 * jax.random.normal(next(keys), (L, M))

    # feature_mixing: M -> O, ff=F
    fm2_wp, fm2_bp = lin(M, O, M)
    fm2_w1, fm2_b1 = lin(M, F, M)
    fm2_w2, fm2_b2 = lin(F, O, F)
    fm2_g = jnp.ones((L, O), jnp.float32) + 0.05 * jax.random.normal(next(keys), (L, O))
    fm2_be = 0.05 * jax.random.normal(next(keys), (L, O))

    return [fm1_wp, fm1_bp, fm1_w1, fm1_b1, fm1_w2, fm1_b2, fm1_g, fm1_be,
            tm_w, tm_b, tm_g, tm_be,
            fm2_wp, fm2_bp, fm2_w1, fm2_b1, fm2_w2, fm2_b2, fm2_g, fm2_be]


if __name__ == "__main__":
    # Small shapes consistent with the module's forward:
    #   x:        (batch, sequence_length, input_dim)
    #   x_static: (batch, sequence_length, static_cov_dim)
    B, L = 2, 8
    INPUT_DIM, STATIC_COV_DIM, OUTPUT_DIM, FF_SIZE = 4, 3, 6, 32

    key = jax.random.PRNGKey(0)
    kx, ks, kp = jax.random.split(key, 3)
    x = jax.random.normal(kx, (B, L, INPUT_DIM), jnp.float32)
    x_static = jax.random.normal(ks, (B, L, STATIC_COV_DIM), jnp.float32)
    params = _init_params(kp, L, INPUT_DIM, STATIC_COV_DIM, OUTPUT_DIM, FF_SIZE)

    out = conditional_mixer_layer(x, x_static, params, OUTPUT_DIM)
    out = jax.block_until_ready(out)
    ref = _reference(x, x_static, params)
    assert out.shape == (B, L, OUTPUT_DIM), out.shape
    assert jnp.allclose(out, ref, rtol=1e-4, atol=1e-4), float(jnp.max(jnp.abs(out - ref)))

    # Exercise the batch-padding path (odd batch with no divisor near the block target).
    B2 = 3
    x2 = jax.random.normal(jax.random.PRNGKey(1), (B2, L, INPUT_DIM), jnp.float32)
    xs2 = jax.random.normal(jax.random.PRNGKey(2), (B2, L, STATIC_COV_DIM), jnp.float32)
    out2 = jax.block_until_ready(conditional_mixer_layer(x2, xs2, params, OUTPUT_DIM))
    ref2 = _reference(x2, xs2, params)
    assert out2.shape == (B2, L, OUTPUT_DIM), out2.shape
    assert jnp.allclose(out2, ref2, rtol=1e-4, atol=1e-4), float(jnp.max(jnp.abs(out2 - ref2)))

    print("KERNEL_OK")
</pallas_src>

<mosaic_0001>
module attributes {stable_mosaic.version = 11 : i64} {
  func.func @_mixer_kernel(%arg0: i32, %arg1: memref<1x8x4xf32, #tpu.memory_space<vmem>>, %arg2: memref<1x8x3xf32, #tpu.memory_space<vmem>>, %arg3: memref<8x8xf32, #tpu.memory_space<vmem>>, %arg4: memref<3x38xf32, #tpu.memory_space<vmem>>, %arg5: memref<32x6xf32, #tpu.memory_space<vmem>>, %arg6: memref<4x38xf32, #tpu.memory_space<vmem>>, %arg7: memref<6x38xf32, #tpu.memory_space<vmem>>, %arg8: memref<32x6xf32, #tpu.memory_space<vmem>>, %arg9: memref<8x33xf32, #tpu.memory_space<vmem>>, %arg10: memref<1x88xf32, #tpu.memory_space<vmem>>, %arg11: memref<1x48xf32, #tpu.memory_space<vmem>>, %arg12: memref<1x48xf32, #tpu.memory_space<vmem>>, %arg13: memref<1x1x48xf32, #tpu.memory_space<vmem>>) attributes {dimension_semantics = [#tpu.dimension_semantics<parallel>], iteration_bounds = array<i64: 2>, scalar_prefetch = 0 : i64, scratch_operands = 0 : i64, tpu.core_type = #tpu.core_type<tc>, window_params = [{transform_indices = @transform_0, window_bounds = array<i64: 1, 8, 4>}, {transform_indices = @transform_1, window_bounds = array<i64: 1, 8, 3>}, {pipeline_mode = #tpu.pipeline_mode<synchronous>, transform_indices = @transform_2, window_bounds = array<i64: 8, 8>}, {pipeline_mode = #tpu.pipeline_mode<synchronous>, transform_indices = @transform_3, window_bounds = array<i64: 3, 38>}, {pipeline_mode = #tpu.pipeline_mode<synchronous>, transform_indices = @transform_4, window_bounds = array<i64: 32, 6>}, {pipeline_mode = #tpu.pipeline_mode<synchronous>, transform_indices = @transform_5, window_bounds = array<i64: 4, 38>}, {pipeline_mode = #tpu.pipeline_mode<synchronous>, transform_indices = @transform_6, window_bounds = array<i64: 6, 38>}, {pipeline_mode = #tpu.pipeline_mode<synchronous>, transform_indices = @transform_7, window_bounds = array<i64: 32, 6>}, {pipeline_mode = #tpu.pipeline_mode<synchronous>, transform_indices = @transform_8, window_bounds = array<i64: 8, 33>}, {pipeline_mode = #tpu.pipeline_mode<synchronous>, transform_indices = @transform_9, window_bounds = array<i64: 1, 88>}, {pipeline_mode = #tpu.pipeline_mode<synchronous>, transform_indices = @transform_10, window_bounds = array<i64: 1, 48>}, {pipeline_mode = #tpu.pipeline_mode<synchronous>, transform_indices = @transform_11, window_bounds = array<i64: 1, 48>}, {transform_indices = @transform_12, window_bounds = array<i64: 1, 1, 48>}]} {
    %c0 = arith.constant 0 : index
    %c0_0 = arith.constant 0 : index
    %c0_1 = arith.constant 0 : index
    %0 = vector.load %arg1[%c0, %c0_0, %c0_1] : memref<1x8x4xf32, #tpu.memory_space<vmem>>, vector<1x8x4xf32>
    %c0_2 = arith.constant 0 : index
    %c0_3 = arith.constant 0 : index
    %c0_4 = arith.constant 0 : index
    %1 = vector.load %arg2[%c0_2, %c0_3, %c0_4] : memref<1x8x3xf32, #tpu.memory_space<vmem>>, vector<1x8x3xf32>
    %c0_5 = arith.constant 0 : index
    %c0_6 = arith.constant 0 : index
    %2 = vector.load %arg9[%c0_5, %c0_6] : memref<8x33xf32, #tpu.memory_space<vmem>>, vector<8x33xf32>
    %3 = vector.extract_strided_slice %2 {offsets = [0, 0], sizes = [8, 1], strides = [1, 1]} : vector<8x33xf32> to vector<8x1xf32>
    %4 = vector.extract_strided_slice %2 {offsets = [0, 1], sizes = [8, 4], strides = [1, 1]} : vector<8x33xf32> to vector<8x4xf32>
    %5 = vector.extract_strided_slice %2 {offsets = [0, 5], sizes = [8, 6], strides = [1, 1]} : vector<8x33xf32> to vector<8x6xf32>
    %6 = vector.extract_strided_slice %2 {offsets = [0, 11], sizes = [8, 4], strides = [1, 1]} : vector<8x33xf32> to vector<8x4xf32>
    %7 = vector.extract_strided_slice %2 {offsets = [0, 15], sizes = [8, 6], strides = [1, 1]} : vector<8x33xf32> to vector<8x6xf32>
    %8 = vector.extract_strided_slice %2 {offsets = [0, 21], sizes = [8, 6], strides = [1, 1]} : vector<8x33xf32> to vector<8x6xf32>
    %9 = vector.extract_strided_slice %2 {offsets = [0, 27], sizes = [8, 6], strides = [1, 1]} : vector<8x33xf32> to vector<8x6xf32>
    %c0_7 = arith.constant 0 : index
    %c0_8 = arith.constant 0 : index
    %10 = vector.load %arg10[%c0_7, %c0_8] : memref<1x88xf32, #tpu.memory_space<vmem>>, vector<1x88xf32>
    %11 = vector.extract_strided_slice %10 {offsets = [0, 0], sizes = [1, 38], strides = [1, 1]} : vector<1x88xf32> to vector<1x38xf32>
    %12 = vector.extract_strided_slice %10 {offsets = [0, 38], sizes = [1, 6], strides = [1, 1]} : vector<1x88xf32> to vector<1x6xf32>
    %13 = vector.extract_strided_slice %10 {offsets = [0, 44], sizes = [1, 38], strides = [1, 1]} : vector<1x88xf32> to vector<1x38xf32>
    %14 = vector.extract_strided_slice %10 {offsets = [0, 82], sizes = [1, 6], strides = [1, 1]} : vector<1x88xf32> to vector<1x6xf32>
    %15 = vector.shape_cast %1 : vector<1x8x3xf32> to vector<8x3xf32>
    %c0_9 = arith.constant 0 : index
    %c0_10 = arith.constant 0 : index
    %16 = vector.load %arg4[%c0_9, %c0_10] : memref<3x38xf32, #tpu.memory_space<vmem>>, vector<3x38xf32>
    %cst = arith.constant dense<0.000000e+00> : vector<8x38xf32>
    %17 = tpu.matmul %15, %16, %cst {dimension_numbers = #tpu.dot_dimension_numbers<[1], [0], [0], [1], [0, 0, 1, 1], [], []>} : vector<8x3xf32>, vector<3x38xf32>, vector<8x38xf32> -> vector<8x38xf32>
    %18 = vector.broadcast %11 : vector<1x38xf32> to vector<8x38xf32>
    %19 = arith.addf %17, %18 : vector<8x38xf32>
    %20 = vector.extract_strided_slice %19 {offsets = [0, 0], sizes = [8, 6], strides = [1, 1]} : vector<8x38xf32> to vector<8x6xf32>
    %21 = vector.extract_strided_slice %19 {offsets = [0, 6], sizes = [8, 32], strides = [1, 1]} : vector<8x38xf32> to vector<8x32xf32>
    %cst_11 = arith.constant 0.000000e+00 : f32
    %22 = vector.broadcast %cst_11 : f32 to vector<8x32xf32>
    %23 = arith.maximumf %21, %22 : vector<8x32xf32>
    %c0_12 = arith.constant 0 : index
    %c0_13 = arith.constant 0 : index
    %24 = vector.load %arg5[%c0_12, %c0_13] : memref<32x6xf32, #tpu.memory_space<vmem>>, vector<32x6xf32>
    %cst_14 = arith.constant dense<0.000000e+00> : vector<8x6xf32>
    %25 = tpu.matmul %23, %24, %cst_14 {dimension_numbers = #tpu.dot_dimension_numbers<[1], [0], [0], [1], [0, 0, 1, 1], [], []>} : vector<8x32xf32>, vector<32x6xf32>, vector<8x6xf32> -> vector<8x6xf32>
    %26 = arith.addf %20, %25 : vector<8x6xf32>
    %27 = vector.broadcast %12 : vector<1x6xf32> to vector<8x6xf32>
    %28 = arith.addf %26, %27 : vector<8x6xf32>
    %29 = vector.shape_cast %28 : vector<8x6xf32> to vector<1x8x6xf32>
    %cst_15 = arith.constant dense<0.000000e+00> : vector<1xf32>
    %30 = vector.multi_reduction <add>, %29, %cst_15 [1, 2] : vector<1x8x6xf32> to vector<1xf32>
    %31 = vector.shape_cast %30 : vector<1xf32> to vector<1x1x1xf32>
    %cst_16 = arith.constant 4.800000e+01 : f32
    %32 = vector.broadcast %cst_16 : f32 to vector<1x1x1xf32>
    %33 = arith.divf %31, %32 : vector<1x1x1xf32>
    %34 = vector.broadcast %33 : vector<1x1x1xf32> to vector<1x8x6xf32>
    %35 = arith.subf %29, %34 : vector<1x8x6xf32>
    %36 = arith.mulf %35, %35 : vector<1x8x6xf32>
    %cst_17 = arith.constant dense<0.000000e+00> : vector<1xf32>
    %37 = vector.multi_reduction <add>, %36, %cst_17 [1, 2] : vector<1x8x6xf32> to vector<1xf32>
    %38 = vector.shape_cast %37 : vector<1xf32> to vector<1x1x1xf32>
    %cst_18 = arith.constant 4.800000e+01 : f32
    %39 = vector.broadcast %cst_18 : f32 to vector<1x1x1xf32>
    %40 = arith.divf %38, %39 : vector<1x1x1xf32>
    %cst_19 = arith.constant 9.99999974E-6 : f32
    %41 = vector.broadcast %cst_19 : f32 to vector<1x1x1xf32>
    %42 = arith.addf %40, %41 : vector<1x1x1xf32>
    %43 = math.rsqrt %42 : vector<1x1x1xf32>
    %44 = vector.broadcast %43 : vector<1x1x1xf32> to vector<1x8x6xf32>
    %45 = arith.mulf %35, %44 : vector<1x8x6xf32>
    %46 = vector.shape_cast %8 : vector<8x6xf32> to vector<1x8x6xf32>
    %47 = arith.mulf %45, %46 : vector<1x8x6xf32>
    %48 = vector.shape_cast %9 : vector<8x6xf32> to vector<1x8x6xf32>
    %49 = arith.addf %47, %48 : vector<1x8x6xf32>
    %c0_20 = arith.constant 0 : index
    %c0_21 = arith.constant 0 : index
    %50 = vector.load %arg3[%c0_20, %c0_21] : memref<8x8xf32, #tpu.memory_space<vmem>>, vector<8x8xf32>
    %51 = vector.shape_cast %50 : vector<8x8xf32> to vector<1x8x8xf32>
    "tpu.trace_start"() <{level = 10 : i32, message = "btl,bld->btd"}> : () -> ()
    %cst_22 = arith.constant dense<0.000000e+00> : vector<1x8x4xf32>
    %52 = tpu.matmul %51, %0, %cst_22 {dimension_numbers = #tpu.dot_dimension_numbers<[2], [1], [1], [2], [0, 0, 0, 1, 1, 2], [0], [0]>} : vector<1x8x8xf32>, vector<1x8x4xf32>, vector<1x8x4xf32> -> vector<1x8x4xf32>
    %cst_23 = arith.constant dense<0.000000e+00> : vector<1x8x6xf32>
    %53 = tpu.matmul %51, %49, %cst_23 {dimension_numbers = #tpu.dot_dimension_numbers<[2], [1], [1], [2], [0, 0, 0, 1, 1, 2], [0], [0]>} : vector<1x8x8xf32>, vector<1x8x6xf32>, vector<1x8x6xf32> -> vector<1x8x6xf32>
    "tpu.trace_stop"() : () -> ()
    %54 = vector.shape_cast %3 : vector<8x1xf32> to vector<1x8x1xf32>
    %55 = vector.broadcast %54 : vector<1x8x1xf32> to vector<1x8x4xf32>
    %56 = arith.addf %52, %55 : vector<1x8x4xf32>
    %cst_24 = arith.constant 0.000000e+00 : f32
    %57 = vector.broadcast %cst_24 : f32 to vector<1x8x4xf32>
    %58 = arith.maximumf %56, %57 : vector<1x8x4xf32>
    %59 = arith.addf %0, %58 : vector<1x8x4xf32>
    %60 = vector.shape_cast %3 : vector<8x1xf32> to vector<1x8x1xf32>
    %61 = vector.broadcast %60 : vector<1x8x1xf32> to vector<1x8x6xf32>
    %62 = arith.addf %53, %61 : vector<1x8x6xf32>
    %cst_25 = arith.constant 0.000000e+00 : f32
    %63 = vector.broadcast %cst_25 : f32 to vector<1x8x6xf32>
    %64 = arith.maximumf %62, %63 : vector<1x8x6xf32>
    %65 = arith.addf %49, %64 : vector<1x8x6xf32>
    %cst_26 = arith.constant dense<0.000000e+00> : vector<1xf32>
    %66 = vector.multi_reduction <add>, %59, %cst_26 [1, 2] : vector<1x8x4xf32> to vector<1xf32>
    %67 = vector.shape_cast %66 : vector<1xf32> to vector<1x1x1xf32>
    %cst_27 = arith.constant dense<0.000000e+00> : vector<1xf32>
    %68 = vector.multi_reduction <add>, %65, %cst_27 [1, 2] : vector<1x8x6xf32> to vector<1xf32>
    %69 = vector.shape_cast %68 : vector<1xf32> to vector<1x1x1xf32>
    %70 = arith.addf %67, %69 : vector<1x1x1xf32>
    %cst_28 = arith.constant 8.000000e+01 : f32
    %71 = vector.broadcast %cst_28 : f32 to vector<1x1x1xf32>
    %72 = arith.divf %70, %71 : vector<1x1x1xf32>
    %73 = vector.broadcast %72 : vector<1x1x1xf32> to vector<1x8x4xf32>
    %74 = arith.subf %59, %73 : vector<1x8x4xf32>
    %75 = vector.broadcast %72 : vector<1x1x1xf32> to vector<1x8x6xf32>
    %76 = arith.subf %65, %75 : vector<1x8x6xf32>
    %77 = arith.mulf %74, %74 : vector<1x8x4xf32>
    %cst_29 = arith.constant dense<0.000000e+00> : vector<1xf32>
    %78 = vector.multi_reduction <add>, %77, %cst_29 [1, 2] : vector<1x8x4xf32> to vector<1xf32>
    %79 = vector.shape_cast %78 : vector<1xf32> to vector<1x1x1xf32>
    %80 = arith.mulf %76, %76 : vector<1x8x6xf32>
    %cst_30 = arith.constant dense<0.000000e+00> : vector<1xf32>
    %81 = vector.multi_reduction <add>, %80, %cst_30 [1, 2] : vector<1x8x6xf32> to vector<1xf32>
    %82 = vector.shape_cast %81 : vector<1xf32> to vector<1x1x1xf32>
    %83 = arith.addf %79, %82 : vector<1x1x1xf32>
    %cst_31 = arith.constant 8.000000e+01 : f32
    %84 = vector.broadcast %cst_31 : f32 to vector<1x1x1xf32>
    %85 = arith.divf %83, %84 : vector<1x1x1xf32>
    %cst_32 = arith.constant 9.99999974E-6 : f32
    %86 = vector.broadcast %cst_32 : f32 to vector<1x1x1xf32>
    %87 = arith.addf %85, %86 : vector<1x1x1xf32>
    %88 = math.rsqrt %87 : vector<1x1x1xf32>
    %89 = vector.broadcast %88 : vector<1x1x1xf32> to vector<1x8x4xf32>
    %90 = arith.mulf %74, %89 : vector<1x8x4xf32>
    %91 = vector.shape_cast %4 : vector<8x4xf32> to vector<1x8x4xf32>
    %92 = arith.mulf %90, %91 : vector<1x8x4xf32>
    %93 = vector.shape_cast %6 : vector<8x4xf32> to vector<1x8x4xf32>
    %94 = arith.addf %92, %93 : vector<1x8x4xf32>
    %95 = vector.broadcast %88 : vector<1x1x1xf32> to vector<1x8x6xf32>
    %96 = arith.mulf %76, %95 : vector<1x8x6xf32>
    %97 = vector.shape_cast %5 : vector<8x6xf32> to vector<1x8x6xf32>
    %98 = arith.mulf %96, %97 : vector<1x8x6xf32>
    %99 = vector.shape_cast %7 : vector<8x6xf32> to vector<1x8x6xf32>
    %100 = arith.addf %98, %99 : vector<1x8x6xf32>
    %101 = vector.shape_cast %94 : vector<1x8x4xf32> to vector<8x4xf32>
    %c0_33 = arith.constant 0 : index
    %c0_34 = arith.constant 0 : index
    %102 = vector.load %arg6[%c0_33, %c0_34] : memref<4x38xf32, #tpu.memory_space<vmem>>, vector<4x38xf32>
    %cst_35 = arith.constant dense<0.000000e+00> : vector<8x38xf32>
    %103 = tpu.matmul %101, %102, %cst_35 {dimension_numbers = #tpu.dot_dimension_numbers<[1], [0], [0], [1], [0, 0, 1, 1], [], []>} : vector<8x4xf32>, vector<4x38xf32>, vector<8x38xf32> -> vector<8x38xf32>
    %104 = vector.shape_cast %100 : vector<1x8x6xf32> to vector<8x6xf32>
    %c0_36 = arith.constant 0 : index
    %c0_37 = arith.constant 0 : index
    %105 = vector.load %arg7[%c0_36, %c0_37] : memref<6x38xf32, #tpu.memory_space<vmem>>, vector<6x38xf32>
    %cst_38 = arith.constant dense<0.000000e+00> : vector<8x38xf32>
    %106 = tpu.matmul %104, %105, %cst_38 {dimension_numbers = #tpu.dot_dimension_numbers<[1], [0], [0], [1], [0, 0, 1, 1], [], []>} : vector<8x6xf32>, vector<6x38xf32>, vector<8x38xf32> -> vector<8x38xf32>
    %107 = arith.addf %103, %106 : vector<8x38xf32>
    %108 = vector.broadcast %13 : vector<1x38xf32> to vector<8x38xf32>
    %109 = arith.addf %107, %108 : vector<8x38xf32>
    %110 = vector.extract_strided_slice %109 {offsets = [0, 0], sizes = [8, 6], strides = [1, 1]} : vector<8x38xf32> to vector<8x6xf32>
    %111 = vector.extract_strided_slice %109 {offsets = [0, 6], sizes = [8, 32], strides = [1, 1]} : vector<8x38xf32> to vector<8x32xf32>
    %cst_39 = arith.constant 0.000000e+00 : f32
    %112 = vector.broadcast %cst_39 : f32 to vector<8x32xf32>
    %113 = arith.maximumf %111, %112 : vector<8x32xf32>
    %c0_40 = arith.constant 0 : index
    %c0_41 = arith.constant 0 : index
    %114 = vector.load %arg8[%c0_40, %c0_41] : memref<32x6xf32, #tpu.memory_space<vmem>>, vector<32x6xf32>
    %cst_42 = arith.constant dense<0.000000e+00> : vector<8x6xf32>
    %115 = tpu.matmul %113, %114, %cst_42 {dimension_numbers = #tpu.dot_dimension_numbers<[1], [0], [0], [1], [0, 0, 1, 1], [], []>} : vector<8x32xf32>, vector<32x6xf32>, vector<8x6xf32> -> vector<8x6xf32>
    %116 = arith.addf %110, %115 : vector<8x6xf32>
    %117 = vector.broadcast %14 : vector<1x6xf32> to vector<8x6xf32>
    %118 = arith.addf %116, %117 : vector<8x6xf32>
    %119 = vector.shape_cast %118 : vector<8x6xf32> to vector<1x48xf32>
    %cst_43 = arith.constant dense<0.000000e+00> : vector<1xf32>
    %120 = vector.multi_reduction <add>, %119, %cst_43 [1] : vector<1x48xf32> to vector<1xf32>
    %121 = vector.shape_cast %120 : vector<1xf32> to vector<1x1xf32>
    %cst_44 = arith.constant 4.800000e+01 : f32
    %122 = vector.broadcast %cst_44 : f32 to vector<1x1xf32>
    %123 = arith.divf %121, %122 : vector<1x1xf32>
    %124 = vector.broadcast %123 : vector<1x1xf32> to vector<1x48xf32>
    %125 = arith.subf %119, %124 : vector<1x48xf32>
    %126 = arith.mulf %125, %125 : vector<1x48xf32>
    %cst_45 = arith.constant dense<0.000000e+00> : vector<1xf32>
    %127 = vector.multi_reduction <add>, %126, %cst_45 [1] : vector<1x48xf32> to vector<1xf32>
    %128 = vector.shape_cast %127 : vector<1xf32> to vector<1x1xf32>
    %cst_46 = arith.constant 4.800000e+01 : f32
    %129 = vector.broadcast %cst_46 : f32 to vector<1x1xf32>
    %130 = arith.divf %128, %129 : vector<1x1xf32>
    %cst_47 = arith.constant 9.99999974E-6 : f32
    %131 = vector.broadcast %cst_47 : f32 to vector<1x1xf32>
    %132 = arith.addf %130, %131 : vector<1x1xf32>
    %133 = math.rsqrt %132 : vector<1x1xf32>
    %134 = vector.broadcast %133 : vector<1x1xf32> to vector<1x48xf32>
    %135 = arith.mulf %125, %134 : vector<1x48xf32>
    %c0_48 = arith.constant 0 : index
    %c0_49 = arith.constant 0 : index
    %136 = vector.load %arg11[%c0_48, %c0_49] : memref<1x48xf32, #tpu.memory_space<vmem>>, vector<1x48xf32>
    %137 = arith.mulf %135, %136 : vector<1x48xf32>
    %c0_50 = arith.constant 0 : index
    %c0_51 = arith.constant 0 : index
    %138 = vector.load %arg12[%c0_50, %c0_51] : memref<1x48xf32, #tpu.memory_space<vmem>>, vector<1x48xf32>
    %139 = arith.addf %137, %138 : vector<1x48xf32>
    %140 = vector.shape_cast %139 : vector<1x48xf32> to vector<1x1x48xf32>
    %c0_52 = arith.constant 0 : index
    %c0_53 = arith.constant 0 : index
    %c0_54 = arith.constant 0 : index
    %141 = vector.load %arg13[%c0_52, %c0_53, %c0_54] : memref<1x1x48xf32, #tpu.memory_space<vmem>>, vector<1x1x48xf32>
    tpu.vector_store %arg13[%c0_52, %c0_53, %c0_54], %140 {strides = array<i32>} : memref<1x1x48xf32, #tpu.memory_space<vmem>>, vector<1x1x48xf32>,
    return
  }
  func.func @transform_0(%arg0: i32) -> (i32, i32, i32) {
    %c0_i32 = arith.constant 0 : i32
    %c0_i32_0 = arith.constant 0 : i32
    %c0_i32_1 = arith.constant 0 : i32
    return %arg0, %c0_i32, %c0_i32_0 : i32, i32, i32
  }
  func.func @transform_1(%arg0: i32) -> (i32, i32, i32) {
    %c0_i32 = arith.constant 0 : i32
    %c0_i32_0 = arith.constant 0 : i32
    %c0_i32_1 = arith.constant 0 : i32
    return %arg0, %c0_i32, %c0_i32_0 : i32, i32, i32
  }
  func.func @transform_2(%arg0: i32) -> (i32, i32) {
    %c0_i32 = arith.constant 0 : i32
    %c0_i32_0 = arith.constant 0 : i32
    %c0_i32_1 = arith.constant 0 : i32
    return %c0_i32, %c0_i32_0 : i32, i32
  }
  func.func @transform_3(%arg0: i32) -> (i32, i32) {
    %c0_i32 = arith.constant 0 : i32
    %c0_i32_0 = arith.constant 0 : i32
    %c0_i32_1 = arith.constant 0 : i32
    return %c0_i32, %c0_i32_0 : i32, i32
  }
  func.func @transform_4(%arg0: i32) -> (i32, i32) {
    %c0_i32 = arith.constant 0 : i32
    %c0_i32_0 = arith.constant 0 : i32
    %c0_i32_1 = arith.constant 0 : i32
    return %c0_i32, %c0_i32_0 : i32, i32
  }
  func.func @transform_5(%arg0: i32) -> (i32, i32) {
    %c0_i32 = arith.constant 0 : i32
    %c0_i32_0 = arith.constant 0 : i32
    %c0_i32_1 = arith.constant 0 : i32
    return %c0_i32, %c0_i32_0 : i32, i32
  }
  func.func @transform_6(%arg0: i32) -> (i32, i32) {
    %c0_i32 = arith.constant 0 : i32
    %c0_i32_0 = arith.constant 0 : i32
    %c0_i32_1 = arith.constant 0 : i32
    return %c0_i32, %c0_i32_0 : i32, i32
  }
  func.func @transform_7(%arg0: i32) -> (i32, i32) {
    %c0_i32 = arith.constant 0 : i32
    %c0_i32_0 = arith.constant 0 : i32
    %c0_i32_1 = arith.constant 0 : i32
    return %c0_i32, %c0_i32_0 : i32, i32
  }
  func.func @transform_8(%arg0: i32) -> (i32, i32) {
    %c0_i32 = arith.constant 0 : i32
    %c0_i32_0 = arith.constant 0 : i32
    %c0_i32_1 = arith.constant 0 : i32
    return %c0_i32, %c0_i32_0 : i32, i32
  }
  func.func @transform_9(%arg0: i32) -> (i32, i32) {
    %c0_i32 = arith.constant 0 : i32
    %c0_i32_0 = arith.constant 0 : i32
    %c0_i32_1 = arith.constant 0 : i32
    return %c0_i32, %c0_i32_0 : i32, i32
  }
  func.func @transform_10(%arg0: i32) -> (i32, i32) {
    %c0_i32 = arith.constant 0 : i32
    %c0_i32_0 = arith.constant 0 : i32
    %c0_i32_1 = arith.constant 0 : i32
    return %c0_i32, %c0_i32_0 : i32, i32
  }
  func.func @transform_11(%arg0: i32) -> (i32, i32) {
    %c0_i32 = arith.constant 0 : i32
    %c0_i32_0 = arith.constant 0 : i32
    %c0_i32_1 = arith.constant 0 : i32
    return %c0_i32, %c0_i32_0 : i32, i32
  }
  func.func @transform_12(%arg0: i32) -> (i32, i32, i32) {
    %c0_i32 = arith.constant 0 : i32
    %c0_i32_0 = arith.constant 0 : i32
    %c0_i32_1 = arith.constant 0 : i32
    return %arg0, %c0_i32, %c0_i32_0 : i32, i32, i32
  }
}

module attributes {stable_mosaic.version = 11 : i64} {
  func.func @_mixer_kernel(%arg0: i32, %arg1: memref<1x8x4xf32, #tpu.memory_space<vmem>>, %arg2: memref<1x8x3xf32, #tpu.memory_space<vmem>>, %arg3: memref<8x8xf32, #tpu.memory_space<vmem>>, %arg4: memref<3x38xf32, #tpu.memory_space<vmem>>, %arg5: memref<32x6xf32, #tpu.memory_space<vmem>>, %arg6: memref<4x38xf32, #tpu.memory_space<vmem>>, %arg7: memref<6x38xf32, #tpu.memory_space<vmem>>, %arg8: memref<32x6xf32, #tpu.memory_space<vmem>>, %arg9: memref<8x33xf32, #tpu.memory_space<vmem>>, %arg10: memref<1x88xf32, #tpu.memory_space<vmem>>, %arg11: memref<8x6xf32, #tpu.memory_space<vmem>>, %arg12: memref<8x6xf32, #tpu.memory_space<vmem>>, %arg13: memref<1x8x6xf32, #tpu.memory_space<vmem>>) attributes {dimension_semantics = [#tpu.dimension_semantics<parallel>], iteration_bounds = array<i64: 2>, scalar_prefetch = 0 : i64, scratch_operands = 0 : i64, tpu.core_type = #tpu.core_type<tc>, window_params = [{transform_indices = @transform_0, window_bounds = array<i64: 1, 8, 4>}, {transform_indices = @transform_1, window_bounds = array<i64: 1, 8, 3>}, {pipeline_mode = #tpu.pipeline_mode<synchronous>, transform_indices = @transform_2, window_bounds = array<i64: 8, 8>}, {pipeline_mode = #tpu.pipeline_mode<synchronous>, transform_indices = @transform_3, window_bounds = array<i64: 3, 38>}, {pipeline_mode = #tpu.pipeline_mode<synchronous>, transform_indices = @transform_4, window_bounds = array<i64: 32, 6>}, {pipeline_mode = #tpu.pipeline_mode<synchronous>, transform_indices = @transform_5, window_bounds = array<i64: 4, 38>}, {pipeline_mode = #tpu.pipeline_mode<synchronous>, transform_indices = @transform_6, window_bounds = array<i64: 6, 38>}, {pipeline_mode = #tpu.pipeline_mode<synchronous>, transform_indices = @transform_7, window_bounds = array<i64: 32, 6>}, {pipeline_mode = #tpu.pipeline_mode<synchronous>, transform_indices = @transform_8, window_bounds = array<i64: 8, 33>}, {pipeline_mode = #tpu.pipeline_mode<synchronous>, transform_indices = @transform_9, window_bounds = array<i64: 1, 88>}, {pipeline_mode = #tpu.pipeline_mode<synchronous>, transform_indices = @transform_10, window_bounds = array<i64: 8, 6>}, {pipeline_mode = #tpu.pipeline_mode<synchronous>, transform_indices = @transform_11, window_bounds = array<i64: 8, 6>}, {transform_indices = @transform_12, window_bounds = array<i64: 1, 8, 6>}]} {
    %c0 = arith.constant 0 : index
    %c0_0 = arith.constant 0 : index
    %c0_1 = arith.constant 0 : index
    %0 = vector.load %arg1[%c0, %c0_0, %c0_1] : memref<1x8x4xf32, #tpu.memory_space<vmem>>, vector<1x8x4xf32>
    %c0_2 = arith.constant 0 : index
    %c0_3 = arith.constant 0 : index
    %c0_4 = arith.constant 0 : index
    %1 = vector.load %arg2[%c0_2, %c0_3, %c0_4] : memref<1x8x3xf32, #tpu.memory_space<vmem>>, vector<1x8x3xf32>
    %c0_5 = arith.constant 0 : index
    %c0_6 = arith.constant 0 : index
    %2 = vector.load %arg9[%c0_5, %c0_6] : memref<8x33xf32, #tpu.memory_space<vmem>>, vector<8x33xf32>
    %3 = vector.extract_strided_slice %2 {offsets = [0, 0], sizes = [8, 1], strides = [1, 1]} : vector<8x33xf32> to vector<8x1xf32>
    %4 = vector.extract_strided_slice %2 {offsets = [0, 1], sizes = [8, 4], strides = [1, 1]} : vector<8x33xf32> to vector<8x4xf32>
    %5 = vector.extract_strided_slice %2 {offsets = [0, 5], sizes = [8, 6], strides = [1, 1]} : vector<8x33xf32> to vector<8x6xf32>
    %6 = vector.extract_strided_slice %2 {offsets = [0, 11], sizes = [8, 4], strides = [1, 1]} : vector<8x33xf32> to vector<8x4xf32>
    %7 = vector.extract_strided_slice %2 {offsets = [0, 15], sizes = [8, 6], strides = [1, 1]} : vector<8x33xf32> to vector<8x6xf32>
    %8 = vector.extract_strided_slice %2 {offsets = [0, 21], sizes = [8, 6], strides = [1, 1]} : vector<8x33xf32> to vector<8x6xf32>
    %9 = vector.extract_strided_slice %2 {offsets = [0, 27], sizes = [8, 6], strides = [1, 1]} : vector<8x33xf32> to vector<8x6xf32>
    %c0_7 = arith.constant 0 : index
    %c0_8 = arith.constant 0 : index
    %10 = vector.load %arg10[%c0_7, %c0_8] : memref<1x88xf32, #tpu.memory_space<vmem>>, vector<1x88xf32>
    %11 = vector.extract_strided_slice %10 {offsets = [0, 0], sizes = [1, 38], strides = [1, 1]} : vector<1x88xf32> to vector<1x38xf32>
    %12 = vector.extract_strided_slice %10 {offsets = [0, 38], sizes = [1, 6], strides = [1, 1]} : vector<1x88xf32> to vector<1x6xf32>
    %13 = vector.extract_strided_slice %10 {offsets = [0, 44], sizes = [1, 38], strides = [1, 1]} : vector<1x88xf32> to vector<1x38xf32>
    %14 = vector.extract_strided_slice %10 {offsets = [0, 82], sizes = [1, 6], strides = [1, 1]} : vector<1x88xf32> to vector<1x6xf32>
    %15 = vector.shape_cast %1 : vector<1x8x3xf32> to vector<8x3xf32>
    %c0_9 = arith.constant 0 : index
    %c0_10 = arith.constant 0 : index
    %16 = vector.load %arg4[%c0_9, %c0_10] : memref<3x38xf32, #tpu.memory_space<vmem>>, vector<3x38xf32>
    %cst = arith.constant dense<0.000000e+00> : vector<8x38xf32>
    %17 = tpu.matmul %15, %16, %cst {dimension_numbers = #tpu.dot_dimension_numbers<[1], [0], [0], [1], [0, 0, 1, 1], [], []>} : vector<8x3xf32>, vector<3x38xf32>, vector<8x38xf32> -> vector<8x38xf32>
    %18 = vector.broadcast %11 : vector<1x38xf32> to vector<8x38xf32>
    %19 = arith.addf %17, %18 : vector<8x38xf32>
    %20 = vector.extract_strided_slice %19 {offsets = [0, 0], sizes = [8, 6], strides = [1, 1]} : vector<8x38xf32> to vector<8x6xf32>
    %21 = vector.extract_strided_slice %19 {offsets = [0, 6], sizes = [8, 32], strides = [1, 1]} : vector<8x38xf32> to vector<8x32xf32>
    %cst_11 = arith.constant 0.000000e+00 : f32
    %22 = vector.broadcast %cst_11 : f32 to vector<8x32xf32>
    %23 = arith.maximumf %21, %22 : vector<8x32xf32>
    %c0_12 = arith.constant 0 : index
    %c0_13 = arith.constant 0 : index
    %24 = vector.load %arg5[%c0_12, %c0_13] : memref<32x6xf32, #tpu.memory_space<vmem>>, vector<32x6xf32>
    %cst_14 = arith.constant dense<0.000000e+00> : vector<8x6xf32>
    %25 = tpu.matmul %23, %24, %cst_14 {dimension_numbers = #tpu.dot_dimension_numbers<[1], [0], [0], [1], [0, 0, 1, 1], [], []>} : vector<8x32xf32>, vector<32x6xf32>, vector<8x6xf32> -> vector<8x6xf32>
    %26 = arith.addf %20, %25 : vector<8x6xf32>
    %27 = vector.broadcast %12 : vector<1x6xf32> to vector<8x6xf32>
    %28 = arith.addf %26, %27 : vector<8x6xf32>
    %29 = vector.shape_cast %28 : vector<8x6xf32> to vector<1x8x6xf32>
    %cst_15 = arith.constant dense<0.000000e+00> : vector<1xf32>
    %30 = vector.multi_reduction <add>, %29, %cst_15 [1, 2] : vector<1x8x6xf32> to vector<1xf32>
    %31 = vector.shape_cast %30 : vector<1xf32> to vector<1x1x1xf32>
    %cst_16 = arith.constant 4.800000e+01 : f32
    %32 = vector.broadcast %cst_16 : f32 to vector<1x1x1xf32>
    %33 = arith.divf %31, %32 : vector<1x1x1xf32>
    %34 = vector.broadcast %33 : vector<1x1x1xf32> to vector<1x8x6xf32>
    %35 = arith.subf %29, %34 : vector<1x8x6xf32>
    %36 = arith.mulf %35, %35 : vector<1x8x6xf32>
    %cst_17 = arith.constant dense<0.000000e+00> : vector<1xf32>
    %37 = vector.multi_reduction <add>, %36, %cst_17 [1, 2] : vector<1x8x6xf32> to vector<1xf32>
    %38 = vector.shape_cast %37 : vector<1xf32> to vector<1x1x1xf32>
    %cst_18 = arith.constant 4.800000e+01 : f32
    %39 = vector.broadcast %cst_18 : f32 to vector<1x1x1xf32>
    %40 = arith.divf %38, %39 : vector<1x1x1xf32>
    %cst_19 = arith.constant 9.99999974E-6 : f32
    %41 = vector.broadcast %cst_19 : f32 to vector<1x1x1xf32>
    %42 = arith.addf %40, %41 : vector<1x1x1xf32>
    %43 = math.rsqrt %42 : vector<1x1x1xf32>
    %44 = vector.broadcast %43 : vector<1x1x1xf32> to vector<1x8x6xf32>
    %45 = arith.mulf %35, %44 : vector<1x8x6xf32>
    %46 = vector.shape_cast %8 : vector<8x6xf32> to vector<1x8x6xf32>
    %47 = arith.mulf %45, %46 : vector<1x8x6xf32>
    %48 = vector.shape_cast %9 : vector<8x6xf32> to vector<1x8x6xf32>
    %49 = arith.addf %47, %48 : vector<1x8x6xf32>
    %c0_20 = arith.constant 0 : index
    %c0_21 = arith.constant 0 : index
    %50 = vector.load %arg3[%c0_20, %c0_21] : memref<8x8xf32, #tpu.memory_space<vmem>>, vector<8x8xf32>
    %51 = vector.shape_cast %50 : vector<8x8xf32> to vector<1x8x8xf32>
    "tpu.trace_start"() <{level = 10 : i32, message = "btl,bld->btd"}> : () -> ()
    %cst_22 = arith.constant dense<0.000000e+00> : vector<1x8x4xf32>
    %52 = tpu.matmul %51, %0, %cst_22 {dimension_numbers = #tpu.dot_dimension_numbers<[2], [1], [1], [2], [0, 0, 0, 1, 1, 2], [0], [0]>} : vector<1x8x8xf32>, vector<1x8x4xf32>, vector<1x8x4xf32> -> vector<1x8x4xf32>
    %cst_23 = arith.constant dense<0.000000e+00> : vector<1x8x6xf32>
    %53 = tpu.matmul %51, %49, %cst_23 {dimension_numbers = #tpu.dot_dimension_numbers<[2], [1], [1], [2], [0, 0, 0, 1, 1, 2], [0], [0]>} : vector<1x8x8xf32>, vector<1x8x6xf32>, vector<1x8x6xf32> -> vector<1x8x6xf32>
    "tpu.trace_stop"() : () -> ()
    %54 = vector.shape_cast %3 : vector<8x1xf32> to vector<1x8x1xf32>
    %55 = vector.broadcast %54 : vector<1x8x1xf32> to vector<1x8x4xf32>
    %56 = arith.addf %52, %55 : vector<1x8x4xf32>
    %cst_24 = arith.constant 0.000000e+00 : f32
    %57 = vector.broadcast %cst_24 : f32 to vector<1x8x4xf32>
    %58 = arith.maximumf %56, %57 : vector<1x8x4xf32>
    %59 = arith.addf %0, %58 : vector<1x8x4xf32>
    %60 = vector.shape_cast %3 : vector<8x1xf32> to vector<1x8x1xf32>
    %61 = vector.broadcast %60 : vector<1x8x1xf32> to vector<1x8x6xf32>
    %62 = arith.addf %53, %61 : vector<1x8x6xf32>
    %cst_25 = arith.constant 0.000000e+00 : f32
    %63 = vector.broadcast %cst_25 : f32 to vector<1x8x6xf32>
    %64 = arith.maximumf %62, %63 : vector<1x8x6xf32>
    %65 = arith.addf %49, %64 : vector<1x8x6xf32>
    %cst_26 = arith.constant dense<0.000000e+00> : vector<1xf32>
    %66 = vector.multi_reduction <add>, %59, %cst_26 [1, 2] : vector<1x8x4xf32> to vector<1xf32>
    %67 = vector.shape_cast %66 : vector<1xf32> to vector<1x1x1xf32>
    %cst_27 = arith.constant dense<0.000000e+00> : vector<1xf32>
    %68 = vector.multi_reduction <add>, %65, %cst_27 [1, 2] : vector<1x8x6xf32> to vector<1xf32>
    %69 = vector.shape_cast %68 : vector<1xf32> to vector<1x1x1xf32>
    %70 = arith.addf %67, %69 : vector<1x1x1xf32>
    %cst_28 = arith.constant 8.000000e+01 : f32
    %71 = vector.broadcast %cst_28 : f32 to vector<1x1x1xf32>
    %72 = arith.divf %70, %71 : vector<1x1x1xf32>
    %73 = vector.broadcast %72 : vector<1x1x1xf32> to vector<1x8x4xf32>
    %74 = arith.subf %59, %73 : vector<1x8x4xf32>
    %75 = vector.broadcast %72 : vector<1x1x1xf32> to vector<1x8x6xf32>
    %76 = arith.subf %65, %75 : vector<1x8x6xf32>
    %77 = arith.mulf %74, %74 : vector<1x8x4xf32>
    %cst_29 = arith.constant dense<0.000000e+00> : vector<1xf32>
    %78 = vector.multi_reduction <add>, %77, %cst_29 [1, 2] : vector<1x8x4xf32> to vector<1xf32>
    %79 = vector.shape_cast %78 : vector<1xf32> to vector<1x1x1xf32>
    %80 = arith.mulf %76, %76 : vector<1x8x6xf32>
    %cst_30 = arith.constant dense<0.000000e+00> : vector<1xf32>
    %81 = vector.multi_reduction <add>, %80, %cst_30 [1, 2] : vector<1x8x6xf32> to vector<1xf32>
    %82 = vector.shape_cast %81 : vector<1xf32> to vector<1x1x1xf32>
    %83 = arith.addf %79, %82 : vector<1x1x1xf32>
    %cst_31 = arith.constant 8.000000e+01 : f32
    %84 = vector.broadcast %cst_31 : f32 to vector<1x1x1xf32>
    %85 = arith.divf %83, %84 : vector<1x1x1xf32>
    %cst_32 = arith.constant 9.99999974E-6 : f32
    %86 = vector.broadcast %cst_32 : f32 to vector<1x1x1xf32>
    %87 = arith.addf %85, %86 : vector<1x1x1xf32>
    %88 = math.rsqrt %87 : vector<1x1x1xf32>
    %89 = vector.broadcast %88 : vector<1x1x1xf32> to vector<1x8x4xf32>
    %90 = arith.mulf %74, %89 : vector<1x8x4xf32>
    %91 = vector.shape_cast %4 : vector<8x4xf32> to vector<1x8x4xf32>
    %92 = arith.mulf %90, %91 : vector<1x8x4xf32>
    %93 = vector.shape_cast %6 : vector<8x4xf32> to vector<1x8x4xf32>
    %94 = arith.addf %92, %93 : vector<1x8x4xf32>
    %95 = vector.broadcast %88 : vector<1x1x1xf32> to vector<1x8x6xf32>
    %96 = arith.mulf %76, %95 : vector<1x8x6xf32>
    %97 = vector.shape_cast %5 : vector<8x6xf32> to vector<1x8x6xf32>
    %98 = arith.mulf %96, %97 : vector<1x8x6xf32>
    %99 = vector.shape_cast %7 : vector<8x6xf32> to vector<1x8x6xf32>
    %100 = arith.addf %98, %99 : vector<1x8x6xf32>
    %101 = vector.shape_cast %94 : vector<1x8x4xf32> to vector<8x4xf32>
    %c0_33 = arith.constant 0 : index
    %c0_34 = arith.constant 0 : index
    %102 = vector.load %arg6[%c0_33, %c0_34] : memref<4x38xf32, #tpu.memory_space<vmem>>, vector<4x38xf32>
    %cst_35 = arith.constant dense<0.000000e+00> : vector<8x38xf32>
    %103 = tpu.matmul %101, %102, %cst_35 {dimension_numbers = #tpu.dot_dimension_numbers<[1], [0], [0], [1], [0, 0, 1, 1], [], []>} : vector<8x4xf32>, vector<4x38xf32>, vector<8x38xf32> -> vector<8x38xf32>
    %104 = vector.shape_cast %100 : vector<1x8x6xf32> to vector<8x6xf32>
    %c0_36 = arith.constant 0 : index
    %c0_37 = arith.constant 0 : index
    %105 = vector.load %arg7[%c0_36, %c0_37] : memref<6x38xf32, #tpu.memory_space<vmem>>, vector<6x38xf32>
    %cst_38 = arith.constant dense<0.000000e+00> : vector<8x38xf32>
    %106 = tpu.matmul %104, %105, %cst_38 {dimension_numbers = #tpu.dot_dimension_numbers<[1], [0], [0], [1], [0, 0, 1, 1], [], []>} : vector<8x6xf32>, vector<6x38xf32>, vector<8x38xf32> -> vector<8x38xf32>
    %107 = arith.addf %103, %106 : vector<8x38xf32>
    %108 = vector.broadcast %13 : vector<1x38xf32> to vector<8x38xf32>
    %109 = arith.addf %107, %108 : vector<8x38xf32>
    %110 = vector.extract_strided_slice %109 {offsets = [0, 0], sizes = [8, 6], strides = [1, 1]} : vector<8x38xf32> to vector<8x6xf32>
    %111 = vector.extract_strided_slice %109 {offsets = [0, 6], sizes = [8, 32], strides = [1, 1]} : vector<8x38xf32> to vector<8x32xf32>
    %cst_39 = arith.constant 0.000000e+00 : f32
    %112 = vector.broadcast %cst_39 : f32 to vector<8x32xf32>
    %113 = arith.maximumf %111, %112 : vector<8x32xf32>
    %c0_40 = arith.constant 0 : index
    %c0_41 = arith.constant 0 : index
    %114 = vector.load %arg8[%c0_40, %c0_41] : memref<32x6xf32, #tpu.memory_space<vmem>>, vector<32x6xf32>
    %cst_42 = arith.constant dense<0.000000e+00> : vector<8x6xf32>
    %115 = tpu.matmul %113, %114, %cst_42 {dimension_numbers = #tpu.dot_dimension_numbers<[1], [0], [0], [1], [0, 0, 1, 1], [], []>} : vector<8x32xf32>, vector<32x6xf32>, vector<8x6xf32> -> vector<8x6xf32>
    %116 = arith.addf %110, %115 : vector<8x6xf32>
    %117 = vector.broadcast %14 : vector<1x6xf32> to vector<8x6xf32>
    %118 = arith.addf %116, %117 : vector<8x6xf32>
    %119 = vector.shape_cast %118 : vector<8x6xf32> to vector<1x8x6xf32>
    %c0_43 = arith.constant 0 : index
    %c0_44 = arith.constant 0 : index
    %120 = vector.load %arg11[%c0_43, %c0_44] : memref<8x6xf32, #tpu.memory_space<vmem>>, vector<8x6xf32>
    %c0_45 = arith.constant 0 : index
    %c0_46 = arith.constant 0 : index
    %121 = vector.load %arg12[%c0_45, %c0_46] : memref<8x6xf32, #tpu.memory_space<vmem>>, vector<8x6xf32>
    %cst_47 = arith.constant dense<0.000000e+00> : vector<1xf32>
    %122 = vector.multi_reduction <add>, %119, %cst_47 [1, 2] : vector<1x8x6xf32> to vector<1xf32>
    %123 = vector.shape_cast %122 : vector<1xf32> to vector<1x1x1xf32>
    %cst_48 = arith.constant 4.800000e+01 : f32
    %124 = vector.broadcast %cst_48 : f32 to vector<1x1x1xf32>
    %125 = arith.divf %123, %124 : vector<1x1x1xf32>
    %126 = vector.broadcast %125 : vector<1x1x1xf32> to vector<1x8x6xf32>
    %127 = arith.subf %119, %126 : vector<1x8x6xf32>
    %128 = arith.mulf %127, %127 : vector<1x8x6xf32>
    %cst_49 = arith.constant dense<0.000000e+00> : vector<1xf32>
    %129 = vector.multi_reduction <add>, %128, %cst_49 [1, 2] : vector<1x8x6xf32> to vector<1xf32>
    %130 = vector.shape_cast %129 : vector<1xf32> to vector<1x1x1xf32>
    %cst_50 = arith.constant 4.800000e+01 : f32
    %131 = vector.broadcast %cst_50 : f32 to vector<1x1x1xf32>
    %132 = arith.divf %130, %131 : vector<1x1x1xf32>
    %cst_51 = arith.constant 9.99999974E-6 : f32
    %133 = vector.broadcast %cst_51 : f32 to vector<1x1x1xf32>
    %134 = arith.addf %132, %133 : vector<1x1x1xf32>
    %135 = math.rsqrt %134 : vector<1x1x1xf32>
    %136 = vector.broadcast %135 : vector<1x1x1xf32> to vector<1x8x6xf32>
    %137 = arith.mulf %127, %136 : vector<1x8x6xf32>
    %138 = vector.shape_cast %120 : vector<8x6xf32> to vector<1x8x6xf32>
    %139 = arith.mulf %137, %138 : vector<1x8x6xf32>
    %140 = vector.shape_cast %121 : vector<8x6xf32> to vector<1x8x6xf32>
    %141 = arith.addf %139, %140 : vector<1x8x6xf32>
    %c0_52 = arith.constant 0 : index
    %c0_53 = arith.constant 0 : index
    %c0_54 = arith.constant 0 : index
    %142 = vector.load %arg13[%c0_52, %c0_53, %c0_54] : memref<1x8x6xf32, #tpu.memory_space<vmem>>, vector<1x8x6xf32>
    tpu.vector_store %arg13[%c0_52, %c0_53, %c0_54], %141 {strides = array<i32>} : memref<1x8x6xf32, #tpu.memory_space<vmem>>, vector<1x8x6xf32>,
    return
  }
  func.func @transform_0(%arg0: i32) -> (i32, i32, i32) {
    %c0_i32 = arith.constant 0 : i32
    %c0_i32_0 = arith.constant 0 : i32
    %c0_i32_1 = arith.constant 0 : i32
    return %arg0, %c0_i32, %c0_i32_0 : i32, i32, i32
  }
  func.func @transform_1(%arg0: i32) -> (i32, i32, i32) {
    %c0_i32 = arith.constant 0 : i32
    %c0_i32_0 = arith.constant 0 : i32
    %c0_i32_1 = arith.constant 0 : i32
    return %arg0, %c0_i32, %c0_i32_0 : i32, i32, i32
  }
  func.func @transform_2(%arg0: i32) -> (i32, i32) {
    %c0_i32 = arith.constant 0 : i32
    %c0_i32_0 = arith.constant 0 : i32
    %c0_i32_1 = arith.constant 0 : i32
    return %c0_i32, %c0_i32_0 : i32, i32
  }
  func.func @transform_3(%arg0: i32) -> (i32, i32) {
    %c0_i32 = arith.constant 0 : i32
    %c0_i32_0 = arith.constant 0 : i32
    %c0_i32_1 = arith.constant 0 : i32
    return %c0_i32, %c0_i32_0 : i32, i32
  }
  func.func @transform_4(%arg0: i32) -> (i32, i32) {
    %c0_i32 = arith.constant 0 : i32
    %c0_i32_0 = arith.constant 0 : i32
    %c0_i32_1 = arith.constant 0 : i32
    return %c0_i32, %c0_i32_0 : i32, i32
  }
  func.func @transform_5(%arg0: i32) -> (i32, i32) {
    %c0_i32 = arith.constant 0 : i32
    %c0_i32_0 = arith.constant 0 : i32
    %c0_i32_1 = arith.constant 0 : i32
    return %c0_i32, %c0_i32_0 : i32, i32
  }
  func.func @transform_6(%arg0: i32) -> (i32, i32) {
    %c0_i32 = arith.constant 0 : i32
    %c0_i32_0 = arith.constant 0 : i32
    %c0_i32_1 = arith.constant 0 : i32
    return %c0_i32, %c0_i32_0 : i32, i32
  }
  func.func @transform_7(%arg0: i32) -> (i32, i32) {
    %c0_i32 = arith.constant 0 : i32
    %c0_i32_0 = arith.constant 0 : i32
    %c0_i32_1 = arith.constant 0 : i32
    return %c0_i32, %c0_i32_0 : i32, i32
  }
  func.func @transform_8(%arg0: i32) -> (i32, i32) {
    %c0_i32 = arith.constant 0 : i32
    %c0_i32_0 = arith.constant 0 : i32
    %c0_i32_1 = arith.constant 0 : i32
    return %c0_i32, %c0_i32_0 : i32, i32
  }
  func.func @transform_9(%arg0: i32) -> (i32, i32) {
    %c0_i32 = arith.constant 0 : i32
    %c0_i32_0 = arith.constant 0 : i32
    %c0_i32_1 = arith.constant 0 : i32
    return %c0_i32, %c0_i32_0 : i32, i32
  }
  func.func @transform_10(%arg0: i32) -> (i32, i32) {
    %c0_i32 = arith.constant 0 : i32
    %c0_i32_0 = arith.constant 0 : i32
    %c0_i32_1 = arith.constant 0 : i32
    return %c0_i32, %c0_i32_0 : i32, i32
  }
  func.func @transform_11(%arg0: i32) -> (i32, i32) {
    %c0_i32 = arith.constant 0 : i32
    %c0_i32_0 = arith.constant 0 : i32
    %c0_i32_1 = arith.constant 0 : i32
    return %c0_i32, %c0_i32_0 : i32, i32
  }
  func.func @transform_12(%arg0: i32) -> (i32, i32, i32) {
    %c0_i32 = arith.constant 0 : i32
    %c0_i32_0 = arith.constant 0 : i32
    %c0_i32_1 = arith.constant 0 : i32
    return %arg0, %c0_i32, %c0_i32_0 : i32, i32, i32
  }
}

</mosaic_0001>

<llo_original>
// kernel: tpu_custom_call.1
$region0: #{tpu_custom_call.1}
  #allocation0 [shape = 'u32[]', space=smem, size = 0x4, offset = 0x4, fixed_abs, tag = 'smem constant byte address 0x4 - core index']
  #allocation1 [shape = 'u32[144,128]{1,0:T(1,128)}', space=vmem, size = 0x12000, scoped, tag = 'internal scratch']
  %s0 = inlined_call_operand.vmem [shape: f32[2,8,4], index: 0, kind: input, shape index: {}]
  %s1 = inlined_call_operand.vmem [shape: f32[2,8,3], index: 1, kind: input, shape index: {}]
  %s2 = inlined_call_operand.vmem [shape: f32[8,8], index: 2, kind: input, shape index: {}]
  %s3 = inlined_call_operand.vmem [shape: f32[3,38], index: 3, kind: input, shape index: {}]
  %s4 = inlined_call_operand.vmem [shape: f32[32,6], index: 4, kind: input, shape index: {}]
  %s5 = inlined_call_operand.vmem [shape: f32[4,38], index: 5, kind: input, shape index: {}]
  %s6 = inlined_call_operand.vmem [shape: f32[6,38], index: 6, kind: input, shape index: {}]
  %s7 = inlined_call_operand.vmem [shape: f32[32,6], index: 7, kind: input, shape index: {}]
  %s8 = inlined_call_operand.vmem [shape: f32[8,33], index: 8, kind: input, shape index: {}]
  %s9 = inlined_call_operand.vmem [shape: f32[1,88], index: 9, kind: input, shape index: {}]
  %s10 = inlined_call_operand.vmem [shape: f32[8,6], index: 10, kind: input, shape index: {}]
  %s11 = inlined_call_operand.vmem [shape: f32[8,6], index: 11, kind: input, shape index: {}]
  %s12 = inlined_call_operand.vmem [shape: f32[2,8,6], index: 12, kind: output, shape index: {}]
  %s13 = sld [smem:[#allocation0]]
  $region81: #{tpu_custom_call.1} parent=0
    _
  %s15 = ssub.s32 1, %s13
  %s16 = scalar_select 0, %s15, %s13
  loop: start=0, step=1, limit=4
  $region2: #{tpu_custom_call.1} parent=0 // loop_pre_header
    _
  $region3: #{tpu_custom_call.1} parent=0 // loop_header
    %s18 = sphi 0, %s22
    %p19 = scmp.ge.s32.totalorder %s18, 4
    %s28 = sphi 0, %s30
    %s31 = sphi 0, %s28
    %s32 = sphi 0, %s31
    %s48 = sphi 0, %s32
    %s54 = sphi 0, %s56
    %s57 = sphi 0, %s54
    %s58 = sphi 0, %s57
    %s74 = sphi 0, %s58
    %s78 = sphi 0, %s78
    %s80 = sphi 0, %s78
    %s81 = sphi 0, %s80
    %s95 = sphi 0, %s81
    %s99 = sphi 0, %s99
    %s101 = sphi 0, %s99
    %s102 = sphi 0, %s101
    %s116 = sphi 0, %s102
    %s120 = sphi 0, %s120
    %s122 = sphi 0, %s120
    %s123 = sphi 0, %s122
    %s137 = sphi 0, %s123
    %s141 = sphi 0, %s141
    %s143 = sphi 0, %s141
    %s144 = sphi 0, %s143
    %s158 = sphi 0, %s144
    %s162 = sphi 0, %s162
    %s164 = sphi 0, %s162
    %s165 = sphi 0, %s164
    %s179 = sphi 0, %s165
    %s183 = sphi 0, %s183
    %s185 = sphi 0, %s183
    %s186 = sphi 0, %s185
    %s200 = sphi 0, %s186
    %s204 = sphi 0, %s204
    %s206 = sphi 0, %s204
    %s207 = sphi 0, %s206
    %s221 = sphi 0, %s207
    %s225 = sphi 0, %s225
    %s227 = sphi 0, %s225
    %s228 = sphi 0, %s227
    %s242 = sphi 0, %s228
    %s246 = sphi 0, %s246
    %s248 = sphi 0, %s246
    %s249 = sphi 0, %s248
    %s263 = sphi 0, %s249
    %s267 = sphi 0, %s267
    %s269 = sphi 0, %s267
    %s270 = sphi 0, %s269
    %s284 = sphi 0, %s270
    %s290 = sphi 0, %s292
    %s293 = sphi 0, %s290
    %s294 = sphi 0, %s293
    %s310 = sphi 0, %s294
  $region4: #{tpu_custom_call.1} parent=0 // loop_header_branch
    %21 = sbr.rel (%p19) target = $region8
  $region5: #{tpu_custom_call.1} parent=0 // loop_body
    %s23 = ssub.s32 %s18, 1
    %s24 = ssub.s32 %s18, 2
    %s25 = sadd.s32 %s18, 1
    %s26 = ssub.s32 %s18, %s25
    %p27 = scmp.eq.s32.totalorder %s26, 0
    %s29 = sadd.s32 %s28, 1
    %s30 = scalar_select %p27, %s28, %s29
    %p33 = pneg %p27
    %p34 = scmp.eq.s32.totalorder %s18, 1
    %p35 = por %p33, %p34
    %p36 = scmp.ne.s32.totalorder %s28, %s31
    %p37 = scmp.eq.s32.totalorder %s18, 0
    %p38 = por %p36, %p37
    %p39 = scmp.ne.s32.totalorder %s28, %s31
    %p40 = scmp.eq.s32.totalorder %s23, 1
    %p41 = por %p39, %p40
    %p42 = scmp.ne.s32.totalorder %s31, %s32
    %p43 = scmp.eq.s32.totalorder %s23, 0
    %p44 = por %p42, %p43
    %p45 = scmp.ne.s32.totalorder %s31, %s32
    %p46 = scmp.eq.s32.totalorder %s24, 1
    %p47 = por %p45, %p46
    %p49 = scmp.ne.s32.totalorder %s32, %s48
    %p50 = scmp.eq.s32.totalorder %s24, 0
    %p51 = por %p49, %p50
    %s52 = ssub.s32 %s18, %s25
    %p53 = scmp.eq.s32.totalorder %s52, 0
    %s55 = sadd.s32 %s54, 1
    %s56 = scalar_select %p53, %s54, %s55
    %p59 = pneg %p53
    %p60 = scmp.eq.s32.totalorder %s18, 1
    %p61 = por %p59, %p60
    %p62 = scmp.ne.s32.totalorder %s54, %s57
    %p63 = scmp.eq.s32.totalorder %s18, 0
    %p64 = por %p62, %p63
    %p65 = scmp.ne.s32.totalorder %s54, %s57
    %p66 = scmp.eq.s32.totalorder %s23, 1
    %p67 = por %p65, %p66
    %p68 = scmp.ne.s32.totalorder %s57, %s58
    %p69 = scmp.eq.s32.totalorder %s23, 0
    %p70 = por %p68, %p69
    %p71 = scmp.ne.s32.totalorder %s57, %s58
    %p72 = scmp.eq.s32.totalorder %s24, 1
    %p73 = por %p71, %p72
    %p75 = scmp.ne.s32.totalorder %s58, %s74
    %p76 = scmp.eq.s32.totalorder %s24, 0
    %p77 = por %p75, %p76
    %s79 = sadd.s32 %s78, 1
    %p82 = scmp.eq.s32.totalorder %s18, 1
    %p83 = scmp.ne.s32.totalorder %s78, %s80
    %p84 = scmp.eq.s32.totalorder %s18, 0
    %p85 = por %p83, %p84
    %p86 = scmp.ne.s32.totalorder %s78, %s80
    %p87 = scmp.eq.s32.totalorder %s23, 1
    %p88 = por %p86, %p87
    %p89 = scmp.ne.s32.totalorder %s80, %s81
    %p90 = scmp.eq.s32.totalorder %s23, 0
    %p91 = por %p89, %p90
    %p92 = scmp.ne.s32.totalorder %s80, %s81
    %p93 = scmp.eq.s32.totalorder %s24, 1
    %p94 = por %p92, %p93
    %p96 = scmp.ne.s32.totalorder %s81, %s95
    %p97 = scmp.eq.s32.totalorder %s24, 0
    %p98 = por %p96, %p97
    %s100 = sadd.s32 %s99, 1
    %p103 = scmp.eq.s32.totalorder %s18, 1
    %p104 = scmp.ne.s32.totalorder %s99, %s101
    %p105 = scmp.eq.s32.totalorder %s18, 0
    %p106 = por %p104, %p105
    %p107 = scmp.ne.s32.totalorder %s99, %s101
    %p108 = scmp.eq.s32.totalorder %s23, 1
    %p109 = por %p107, %p108
    %p110 = scmp.ne.s32.totalorder %s101, %s102
    %p111 = scmp.eq.s32.totalorder %s23, 0
    %p112 = por %p110, %p111
    %p113 = scmp.ne.s32.totalorder %s101, %s102
    %p114 = scmp.eq.s32.totalorder %s24, 1
    %p115 = por %p113, %p114
    %p117 = scmp.ne.s32.totalorder %s102, %s116
    %p118 = scmp.eq.s32.totalorder %s24, 0
    %p119 = por %p117, %p118
    %s121 = sadd.s32 %s120, 1
    %p124 = scmp.eq.s32.totalorder %s18, 1
    %p125 = scmp.ne.s32.totalorder %s120, %s122
    %p126 = scmp.eq.s32.totalorder %s18, 0
    %p127 = por %p125, %p126
    %p128 = scmp.ne.s32.totalorder %s120, %s122
    %p129 = scmp.eq.s32.totalorder %s23, 1
    %p130 = por %p128, %p129
    %p131 = scmp.ne.s32.totalorder %s122, %s123
    %p132 = scmp.eq.s32.totalorder %s23, 0
    %p133 = por %p131, %p132
    %p134 = scmp.ne.s32.totalorder %s122, %s123
    %p135 = scmp.eq.s32.totalorder %s24, 1
    %p136 = por %p134, %p135
    %p138 = scmp.ne.s32.totalorder %s123, %s137
    %p139 = scmp.eq.s32.totalorder %s24, 0
    %p140 = por %p138, %p139
    %s142 = sadd.s32 %s141, 1
    %p145 = scmp.eq.s32.totalorder %s18, 1
    %p146 = scmp.ne.s32.totalorder %s141, %s143
    %p147 = scmp.eq.s32.totalorder %s18, 0
    %p148 = por %p146, %p147
    %p149 = scmp.ne.s32.totalorder %s141, %s143
    %p150 = scmp.eq.s32.totalorder %s23, 1
    %p151 = por %p149, %p150
    %p152 = scmp.ne.s32.totalorder %s143, %s144
    %p153 = scmp.eq.s32.totalorder %s23, 0
    %p154 = por %p152, %p153
    %p155 = scmp.ne.s32.totalorder %s143, %s144
    %p156 = scmp.eq.s32.totalorder %s24, 1
    %p157 = por %p155, %p156
    %p159 = scmp.ne.s32.totalorder %s144, %s158
    %p160 = scmp.eq.s32.totalorder %s24, 0
    %p161 = por %p159, %p160
    %s163 = sadd.s32 %s162, 1
    %p166 = scmp.eq.s32.totalorder %s18, 1
    %p167 = scmp.ne.s32.totalorder %s162, %s164
    %p168 = scmp.eq.s32.totalorder %s18, 0
    %p169 = por %p167, %p168
    %p170 = scmp.ne.s32.totalorder %s162, %s164
    %p171 = scmp.eq.s32.totalorder %s23, 1
    %p172 = por %p170, %p171
    %p173 = scmp.ne.s32.totalorder %s164, %s165
    %p174 = scmp.eq.s32.totalorder %s23, 0
    %p175 = por %p173, %p174
    %p176 = scmp.ne.s32.totalorder %s164, %s165
    %p177 = scmp.eq.s32.totalorder %s24, 1
    %p178 = por %p176, %p177
    %p180 = scmp.ne.s32.totalorder %s165, %s179
    %p181 = scmp.eq.s32.totalorder %s24, 0
    %p182 = por %p180, %p181
    %s184 = sadd.s32 %s183, 1
    %p187 = scmp.eq.s32.totalorder %s18, 1
    %p188 = scmp.ne.s32.totalorder %s183, %s185
    %p189 = scmp.eq.s32.totalorder %s18, 0
    %p190 = por %p188, %p189
    %p191 = scmp.ne.s32.totalorder %s183, %s185
    %p192 = scmp.eq.s32.totalorder %s23, 1
    %p193 = por %p191, %p192
    %p194 = scmp.ne.s32.totalorder %s185, %s186
    %p195 = scmp.eq.s32.totalorder %s23, 0
    %p196 = por %p194, %p195
    %p197 = scmp.ne.s32.totalorder %s185, %s186
    %p198 = scmp.eq.s32.totalorder %s24, 1
    %p199 = por %p197, %p198
    %p201 = scmp.ne.s32.totalorder %s186, %s200
    %p202 = scmp.eq.s32.totalorder %s24, 0
    %p203 = por %p201, %p202
    %s205 = sadd.s32 %s204, 1
    %p208 = scmp.eq.s32.totalorder %s18, 1
    %p209 = scmp.ne.s32.totalorder %s204, %s206
    %p210 = scmp.eq.s32.totalorder %s18, 0
    %p211 = por %p209, %p210
    %p212 = scmp.ne.s32.totalorder %s204, %s206
    %p213 = scmp.eq.s32.totalorder %s23, 1
    %p214 = por %p212, %p213
    %p215 = scmp.ne.s32.totalorder %s206, %s207
    %p216 = scmp.eq.s32.totalorder %s23, 0
    %p217 = por %p215, %p216
    %p218 = scmp.ne.s32.totalorder %s206, %s207
    %p219 = scmp.eq.s32.totalorder %s24, 1
    %p220 = por %p218, %p219
    %p222 = scmp.ne.s32.totalorder %s207, %s221
    %p223 = scmp.eq.s32.totalorder %s24, 0
    %p224 = por %p222, %p223
    %s226 = sadd.s32 %s225, 1
    %p229 = scmp.eq.s32.totalorder %s18, 1
    %p230 = scmp.ne.s32.totalorder %s225, %s227
    %p231 = scmp.eq.s32.totalorder %s18, 0
    %p232 = por %p230, %p231
    %p233 = scmp.ne.s32.totalorder %s225, %s227
    %p234 = scmp.eq.s32.totalorder %s23, 1
    %p235 = por %p233, %p234
    %p236 = scmp.ne.s32.totalorder %s227, %s228
    %p237 = scmp.eq.s32.totalorder %s23, 0
    %p238 = por %p236, %p237
    %p239 = scmp.ne.s32.totalorder %s227, %s228
    %p240 = scmp.eq.s32.totalorder %s24, 1
    %p241 = por %p239, %p240
    %p243 = scmp.ne.s32.totalorder %s228, %s242
    %p244 = scmp.eq.s32.totalorder %s24, 0
    %p245 = por %p243, %p244
    %s247 = sadd.s32 %s246, 1
    %p250 = scmp.eq.s32.totalorder %s18, 1
    %p251 = scmp.ne.s32.totalorder %s246, %s248
    %p252 = scmp.eq.s32.totalorder %s18, 0
    %p253 = por %p251, %p252
    %p254 = scmp.ne.s32.totalorder %s246, %s248
    %p255 = scmp.eq.s32.totalorder %s23, 1
    %p256 = por %p254, %p255
    %p257 = scmp.ne.s32.totalorder %s248, %s249
    %p258 = scmp.eq.s32.totalorder %s23, 0
    %p259 = por %p257, %p258
    %p260 = scmp.ne.s32.totalorder %s248, %s249
    %p261 = scmp.eq.s32.totalorder %s24, 1
    %p262 = por %p260, %p261
    %p264 = scmp.ne.s32.totalorder %s249, %s263
    %p265 = scmp.eq.s32.totalorder %s24, 0
    %p266 = por %p264, %p265
    %s268 = sadd.s32 %s267, 1
    %p271 = scmp.eq.s32.totalorder %s18, 1
    %p272 = scmp.ne.s32.totalorder %s267, %s269
    %p273 = scmp.eq.s32.totalorder %s18, 0
    %p274 = por %p272, %p273
    %p275 = scmp.ne.s32.totalorder %s267, %s269
    %p276 = scmp.eq.s32.totalorder %s23, 1
    %p277 = por %p275, %p276
    %p278 = scmp.ne.s32.totalorder %s269, %s270
    %p279 = scmp.eq.s32.totalorder %s23, 0
    %p280 = por %p278, %p279
    %p281 = scmp.ne.s32.totalorder %s269, %s270
    %p282 = scmp.eq.s32.totalorder %s24, 1
    %p283 = por %p281, %p282
    %p285 = scmp.ne.s32.totalorder %s270, %s284
    %p286 = scmp.eq.s32.totalorder %s24, 0
    %p287 = por %p285, %p286
    %s288 = ssub.s32 %s18, %s25
    %p289 = scmp.eq.s32.totalorder %s288, 0
    %s291 = sadd.s32 %s290, 1
    %s292 = scalar_select %p289, %s290, %s291
    %p295 = pneg %p289
    %p296 = scmp.eq.s32.totalorder %s18, 1
    %p297 = por %p295, %p296
    %p298 = scmp.ne.s32.totalorder %s290, %s293
    %p299 = scmp.eq.s32.totalorder %s18, 0
    %p300 = por %p298, %p299
    %p301 = scmp.ne.s32.totalorder %s290, %s293
    %p302 = scmp.eq.s32.totalorder %s23, 1
    %p303 = por %p301, %p302
    %p304 = scmp.ne.s32.totalorder %s293, %s294
    %p305 = scmp.eq.s32.totalorder %s23, 0
    %p306 = por %p304, %p305
    %p307 = scmp.ne.s32.totalorder %s293, %s294
    %p308 = scmp.eq.s32.totalorder %s24, 1
    %p309 = por %p307, %p308
    %p311 = scmp.ne.s32.totalorder %s294, %s310
    %p312 = scmp.eq.s32.totalorder %s24, 0
    %p313 = por %p311, %p312
    %p314 = scmp.le.s32.totalorder 1, %s18
    %p315 = scmp.lt.s32.totalorder %s18, 3
    %p316 = pnand %p314, %p315
    %p317 = pneg %p316
    // Predicated region
    $region9: #{tpu_custom_call.1} parent=5 // pred_check
      _
    $region10: #{tpu_custom_call.1} parent=5 // pred_check_branch
      %319 = sbr.rel (%p316) target = $region12
    $region11: #{tpu_custom_call.1} parent=5 // pred_region
      %s320 = ssub.s32 %s18, 1
      // Predicated region
      $region13: #{tpu_custom_call.1} parent=11 // pred_check
        %p321 = pneg %p91
      $region14: #{tpu_custom_call.1} parent=11 // pred_check_branch
        %323 = sbr.rel (%p321) target = $region16
      $region15: #{tpu_custom_call.1} parent=11 // pred_region
        _
      $region16: #{tpu_custom_call.1} parent=11 // pred_fallthru
        _
      // Predicated region
      $region17: #{tpu_custom_call.1} parent=11 // pred_check
        %p324 = pneg %p112
      $region18: #{tpu_custom_call.1} parent=11 // pred_check_branch
        %326 = sbr.rel (%p324) target = $region20
      $region19: #{tpu_custom_call.1} parent=11 // pred_region
        _
      $region20: #{tpu_custom_call.1} parent=11 // pred_fallthru
        _
      // Predicated region
      $region21: #{tpu_custom_call.1} parent=11 // pred_check
        %p327 = pneg %p133
      $region22: #{tpu_custom_call.1} parent=11 // pred_check_branch
        %329 = sbr.rel (%p327) target = $region24
      $region23: #{tpu_custom_call.1} parent=11 // pred_region
        _
      $region24: #{tpu_custom_call.1} parent=11 // pred_fallthru
        _
      // Predicated region
      $region25: #{tpu_custom_call.1} parent=11 // pred_check
        %p330 = pneg %p154
      $region26: #{tpu_custom_call.1} parent=11 // pred_check_branch
        %332 = sbr.rel (%p330) target = $region28
      $region27: #{tpu_custom_call.1} parent=11 // pred_region
        _
      $region28: #{tpu_custom_call.1} parent=11 // pred_fallthru
        _
      // Predicated region
      $region29: #{tpu_custom_call.1} parent=11 // pred_check
        %p333 = pneg %p175
      $region30: #{tpu_custom_call.1} parent=11 // pred_check_branch
        %335 = sbr.rel (%p333) target = $region32
      $region31: #{tpu_custom_call.1} parent=11 // pred_region
        _
      $region32: #{tpu_custom_call.1} parent=11 // pred_fallthru
        _
      // Predicated region
      $region33: #{tpu_custom_call.1} parent=11 // pred_check
        %p336 = pneg %p196
      $region34: #{tpu_custom_call.1} parent=11 // pred_check_branch
        %338 = sbr.rel (%p336) target = $region36
      $region35: #{tpu_custom_call.1} parent=11 // pred_region
        _
      $region36: #{tpu_custom_call.1} parent=11 // pred_fallthru
        _
      // Predicated region
      $region37: #{tpu_custom_call.1} parent=11 // pred_check
        %p339 = pneg %p217
      $region38: #{tpu_custom_call.1} parent=11 // pred_check_branch
        %341 = sbr.rel (%p339) target = $region40
      $region39: #{tpu_custom_call.1} parent=11 // pred_region
        _
      $region40: #{tpu_custom_call.1} parent=11 // pred_fallthru
        _
      // Predicated region
      $region41: #{tpu_custom_call.1} parent=11 // pred_check
        %p342 = pneg %p238
      $region42: #{tpu_custom_call.1} parent=11 // pred_check_branch
        %344 = sbr.rel (%p342) target = $region44
      $region43: #{tpu_custom_call.1} parent=11 // pred_region
        _
      $region44: #{tpu_custom_call.1} parent=11 // pred_fallthru
        _
      // Predicated region
      $region45: #{tpu_custom_call.1} parent=11 // pred_check
        %p345 = pneg %p259
      $region46: #{tpu_custom_call.1} parent=11 // pred_check_branch
        %347 = sbr.rel (%p345) target = $region48
      $region47: #{tpu_custom_call.1} parent=11 // pred_region
        _
      $region48: #{tpu_custom_call.1} parent=11 // pred_fallthru
        _
      // Predicated region
      $region49: #{tpu_custom_call.1} parent=11 // pred_check
        %p348 = pneg %p280
      $region50: #{tpu_custom_call.1} parent=11 // pred_check_branch
        %350 = sbr.rel (%p348) target = $region52
      $region51: #{tpu_custom_call.1} parent=11 // pred_region
        _
      $region52: #{tpu_custom_call.1} parent=11 // pred_fallthru
        _
    $region12: #{tpu_custom_call.1} parent=5 // pred_fallthru
      _
    %p351 = scmp.lt.s32.totalorder %s18, 2
    // Predicated region
    $region53: #{tpu_custom_call.1} parent=5 // pred_check
      %p352 = pneg %p351
    $region54: #{tpu_custom_call.1} parent=5 // pred_check_branch
      %354 = sbr.rel (%p352) target = $region56
    $region55: #{tpu_custom_call.1} parent=5 // pred_region
      // Predicated region
      $region57: #{tpu_custom_call.1} parent=55 // pred_check
        %p355 = pneg %p38
      $region58: #{tpu_custom_call.1} parent=55 // pred_check_branch
        %357 = sbr.rel (%p355) target = $region60
      $region59: #{tpu_custom_call.1} parent=55 // pred_region
        %p358 = scmp.lt.s32.totalorder %s18, 1
        %s359 = scalar_select %p358, %s18, 1
        %s360 = smul.addr %s359, 8
        %s361 = scalar_lea.vmem %s0, %s360
      $region60: #{tpu_custom_call.1} parent=55 // pred_fallthru
        _
      // Predicated region
      $region61: #{tpu_custom_call.1} parent=55 // pred_check
        %p362 = pneg %p64
      $region62: #{tpu_custom_call.1} parent=55 // pred_check_branch
        %364 = sbr.rel (%p362) target = $region64
      $region63: #{tpu_custom_call.1} parent=55 // pred_region
        %p365 = scmp.lt.s32.totalorder %s18, 1
        %s366 = scalar_select %p365, %s18, 1
        %s367 = smul.addr %s366, 8
        %s368 = scalar_lea.vmem %s1, %s367
      $region64: #{tpu_custom_call.1} parent=55 // pred_fallthru
        _
    $region56: #{tpu_custom_call.1} parent=5 // pred_fallthru
      _
    %p369 = scmp.le.s32.totalorder 1, %s18
    %p370 = scmp.lt.s32.totalorder %s18, 3
    %p371 = pnand %p369, %p370
    %p372 = pneg %p371
    // Predicated region
    $region65: #{tpu_custom_call.1} parent=5 // pred_check
      _
    $region66: #{tpu_custom_call.1} parent=5 // pred_check_branch
      %374 = sbr.rel (%p371) target = $region68
    $region67: #{tpu_custom_call.1} parent=5 // pred_region
      %s375 = ssub.s32 %s18, 1
      %p376 = scmp.lt.s32.totalorder %s23, 1
      %s377 = scalar_select %p376, %s23, 1
      %s378 = smul.addr %s377, 8
      %s379 = scalar_lea.vmem %s0, %s378
      %p380 = pneg %p44
      %p381 = pneg %p41
      %p382 = scmp.lt.s32.totalorder %s23, 1
      %s383 = scalar_select %p382, %s23, 1
      %s384 = smul.addr %s383, 8
      %s385 = scalar_lea.vmem %s1, %s384
      %p386 = pneg %p70
      %p387 = pneg %p67
      %p388 = pneg %p91
      %p389 = pneg %p88
      %p390 = pneg %p112
      %p391 = pneg %p109
      %p392 = pneg %p133
      %p393 = pneg %p130
      %p394 = pneg %p154
      %p395 = pneg %p151
      %p396 = pneg %p175
      %p397 = pneg %p172
      %p398 = pneg %p196
      %p399 = pneg %p193
      %p400 = pneg %p217
      %p401 = pneg %p214
      %p402 = pneg %p238
      %p403 = pneg %p235
      %p404 = pneg %p259
      %p405 = pneg %p256
      %p406 = pneg %p280
      %p407 = pneg %p277
      %p408 = pneg %p306
      %p409 = pneg %p303
      %p410 = scmp.lt.s32.totalorder %s23, 1
      %s411 = scalar_select %p410, %s23, 1
      %s412 = smul.addr %s411, 8
      %s413 = scalar_lea.vmem %s12, %s412
      %p414 = scmp.lt.s32.totalorder %s23, 1
      %s415 = scalar_select %p414, %s23, 1
      %s416 = smul.addr %s415, 8
      %s417 = scalar_lea.vmem %s0, %s416
      %p418 = scmp.lt.s32.totalorder %s23, 1
      %s419 = scalar_select %p418, %s23, 1
      %s420 = smul.addr %s419, 8
      %s421 = scalar_lea.vmem %s1, %s420
      %p422 = scmp.lt.s32.totalorder %s23, 1
      %s423 = scalar_select %p422, %s23, 1
      %s424 = smul.addr %s423, 8
      %s425 = scalar_lea.vmem %s12, %s424
      %v426 = vld [vmem:[%s417] sm:$0xff]
      %v427 = vld [vmem:[%s421] sm:$0xff]
      %v428 = vld [vmem:[%s8] sm:$0xff]
      %v429 = vld [vmem:[%s9] sm:$0x1]
      %v430 = vld [vmem:[%s3] sm:$0x7]
      %v432 = vlaneseq
      %v433 = vshrl.u32 %v432, 7
      %v434 = vsub.s32 0, %v433
      %v435 = vrot.slane %v429, %v434
      %vm437 = vcmask 23552
      %v439 = vsel %vm437, %v427, 0
      %vm441 = vcmask 1042432
      %v443 = vsel %vm441, %v430, 0
      %445 = vmatprep.subr.mxu0 0.0
      %446 = vmatpush1.msra.mxu0 %v443
      %447 = vmatprep.subr.mxu0 0.0
      %448 = vmatpush1.msra.mxu0 0.0
      %449 = vmatprep.subr.mxu0 0.0
      %450 = vmatpush1.msra.mxu0 0.0
      %451 = vmatprep.subr.mxu0 0.0
      %452 = vmatpush1.msra.mxu0 0.0
      %453 = vmatprep.subr.mxu0 0.0
      %454 = vmatpush1.msra.mxu0 0.0
      %455 = vmatprep.subr.mxu0 0.0
      %456 = vmatpush1.msra.mxu0 0.0
      %457 = vmatprep.subr.mxu0 0.0
      %458 = vmatpush1.msra.mxu0 0.0
      %459 = vmatprep.subr.mxu0 0.0
      %460 = vmatpush1.msra.mxu0 0.0
      %461 = vmatprep.subr.mxu0 0.0
      %462 = vmatpush1.msra.mxu0 0.0
      %463 = vmatprep.subr.mxu0 0.0
      %464 = vmatpush1.msra.mxu0 0.0
      %465 = vmatprep.subr.mxu0 0.0
      %466 = vmatpush1.msra.mxu0 0.0
      %467 = vmatprep.subr.mxu0 0.0
      %468 = vmatpush1.msra.mxu0 0.0
      %469 = vmatprep.subr.mxu0 0.0
      %470 = vmatpush1.msra.mxu0 0.0
      %471 = vmatprep.subr.mxu0 0.0
      %472 = vmatpush1.msra.mxu0 0.0
      %473 = vmatprep.subr.mxu0 0.0
      %474 = vmatpush1.msra.mxu0 0.0
      %475 = vmatprep.subr.mxu0 0.0
      %476 = vmatpush1.msra.mxu0 0.0
      %477 = vmatprep.subr.mxu0 0.0
      %478 = vmatpush1.msra.mxu0 0.0
      %479 = vmatprep.subr.mxu0 0.0
      %480 = vmatpush1.msra.mxu0 0.0
      %481 = vmatprep.subr.mxu0 0.0
      %482 = vmatpush1.msra.mxu0 0.0
      %483 = vmatprep.subr.mxu0 0.0
      %484 = vmatpush1.msra.mxu0 0.0
      %485 = vmatprep.subr.mxu0 0.0
      %486 = vmatpush1.msra.mxu0 0.0
      %487 = vmatprep.subr.mxu0 0.0
      %488 = vmatpush1.msra.mxu0 0.0
      %489 = vmatprep.subr.mxu0 0.0
      %490 = vmatpush1.msra.mxu0 0.0
      %491 = vmatprep.subr.mxu0 0.0
      %492 = vmatpush1.msra.mxu0 0.0
      %493 = vmatprep.subr.mxu0 0.0
      %494 = vmatpush1.msra.mxu0 0.0
      %495 = vmatprep.subr.mxu0 0.0
      %496 = vmatpush1.msra.mxu0 0.0
      %497 = vmatprep.subr.mxu0 0.0
      %498 = vmatpush1.msra.mxu0 0.0
      %499 = vmatprep.subr.mxu0 0.0
      %500 = vmatpush1.msra.mxu0 0.0
      %501 = vmatprep.subr.mxu0 0.0
      %502 = vmatpush1.msra.mxu0 0.0
      %503 = vmatprep.subr.mxu0 0.0
      %504 = vmatpush1.msra.mxu0 0.0
      %505 = vmatprep.subr.mxu0 0.0
      %506 = vmatpush1.msra.mxu0 0.0
      %507 = vmatprep.subr.mxu0 0.0
      %508 = vmatpush1.msra.mxu0 0.0
      %509 = vmatprep.mubr.f32.mxu0 0.0
      %510 = vmatmul.mubr.f32.gmra.mrb[0].mxu0 %v439
      %v511 = vpop.f32.mrb[0].mxu0
      %v512 = vadd.f32 %v435, %v511
      %v513 = vpop.f32.mrb[0].mxu0
      %514 = vdwg.mxu0
      %v515 = vmax.f32 %v512, 0.0
      %v516 = vld [vmem:[%s4] sm:$0xff]
      %v517 = vld [vmem:[%s4 + $0x8] sm:$0xff]
      %v518 = vld [vmem:[%s4 + $0x10] sm:$0xff]
      %v519 = vld [vmem:[%s4 + $0x18] sm:$0xff]
      %521 = vrot.lane.b32.xlu0 %v515, 122
      %v522 = vpop.permute.xlu0 %521
      %vm523 = vcmask 261120
      %v524 = vsel %vm523, %v522, 0
      %526 = vmatprep.subr.mxu0 0.0
      %527 = vmatpush1.msra.mxu0 %v516
      %528 = vmatprep.subr.mxu0 0.0
      %529 = vmatpush1.msra.mxu0 %v517
      %530 = vmatprep.subr.mxu0 0.0
      %531 = vmatpush1.msra.mxu0 %v518
      %532 = vmatprep.subr.mxu0 0.0
      %533 = vmatpush1.msra.mxu0 %v519
      %534 = vmatprep.subr.mxu0 0.0
      %535 = vmatpush1.msra.mxu0 0.0
      %536 = vmatprep.subr.mxu0 0.0
      %537 = vmatpush1.msra.mxu0 0.0
      %538 = vmatprep.subr.mxu0 0.0
      %539 = vmatpush1.msra.mxu0 0.0
      %540 = vmatprep.subr.mxu0 0.0
      %541 = vmatpush1.msra.mxu0 0.0
      %542 = vmatprep.subr.mxu0 0.0
      %543 = vmatpush1.msra.mxu0 0.0
      %544 = vmatprep.subr.mxu0 0.0
      %545 = vmatpush1.msra.mxu0 0.0
      %546 = vmatprep.subr.mxu0 0.0
      %547 = vmatpush1.msra.mxu0 0.0
      %548 = vmatprep.subr.mxu0 0.0
      %549 = vmatpush1.msra.mxu0 0.0
      %550 = vmatprep.subr.mxu0 0.0
      %551 = vmatpush1.msra.mxu0 0.0
      %552 = vmatprep.subr.mxu0 0.0
      %553 = vmatpush1.msra.mxu0 0.0
      %554 = vmatprep.subr.mxu0 0.0
      %555 = vmatpush1.msra.mxu0 0.0
      %556 = vmatprep.subr.mxu0 0.0
      %557 = vmatpush1.msra.mxu0 0.0
      %558 = vmatprep.subr.mxu0 0.0
      %559 = vmatpush1.msra.mxu0 0.0
      %560 = vmatprep.subr.mxu0 0.0
      %561 = vmatpush1.msra.mxu0 0.0
      %562 = vmatprep.subr.mxu0 0.0
      %563 = vmatpush1.msra.mxu0 0.0
      %564 = vmatprep.subr.mxu0 0.0
      %565 = vmatpush1.msra.mxu0 0.0
      %566 = vmatprep.subr.mxu0 0.0
      %567 = vmatpush1.msra.mxu0 0.0
      %568 = vmatprep.subr.mxu0 0.0
      %569 = vmatpush1.msra.mxu0 0.0
      %570 = vmatprep.subr.mxu0 0.0
      %571 = vmatpush1.msra.mxu0 0.0
      %572 = vmatprep.subr.mxu0 0.0
      %573 = vmatpush1.msra.mxu0 0.0
      %574 = vmatprep.subr.mxu0 0.0
      %575 = vmatpush1.msra.mxu0 0.0
      %576 = vmatprep.subr.mxu0 0.0
      %577 = vmatpush1.msra.mxu0 0.0
      %578 = vmatprep.subr.mxu0 0.0
      %579 = vmatpush1.msra.mxu0 0.0
      %580 = vmatprep.subr.mxu0 0.0
      %581 = vmatpush1.msra.mxu0 0.0
      %582 = vmatprep.subr.mxu0 0.0
      %583 = vmatpush1.msra.mxu0 0.0
      %584 = vmatprep.subr.mxu0 0.0
      %585 = vmatpush1.msra.mxu0 0.0
      %586 = vmatprep.subr.mxu0 0.0
      %587 = vmatpush1.msra.mxu0 0.0
      %588 = vmatprep.subr.mxu0 0.0
      %589 = vmatpush1.msra.mxu0 0.0
      %590 = vmatprep.mubr.f32.mxu0 0.0
      %591 = vmatmul.mubr.f32.gmra.mrb[0].mxu0 %v524
      %v592 = vpop.f32.mrb[0].mxu0
      %v593 = vadd.f32 0.0, %v592
      %v594 = vpop.f32.mrb[0].mxu0
      %595 = vdwg.mxu0
      %v596 = vadd.f32 %v512, %v593
      %597 = vrot.lane.b32.xlu0 %v435, 90
      %v598 = vpop.permute.xlu0 %597
      %v600 = vadd.f32 %v596, %v598
      %vm601 = vcmask 48128
      %v602 = vsel %vm601, %v600, 0.0
      %603 = vadd.xlane.f32.xlu0 %v602
      %v604 = vpop.xlane.xlu0 %603
      %v605 = vrot.slane %v604, 4
      %v606 = vadd.f32 %v604, %v605
      %v607 = vrot.slane %v606, 2
      %v608 = vadd.f32 %v606, %v607
      %v609 = vrot.slane %v608, 1
      %v610 = vadd.f32 %v608, %v609
      %v611 = vrcp.pop 48.0
      %v612 = vmul.f32 %v610, %v611
      %v613 = vsub.f32 %v600, %v612
      %v614 = vmul.f32 %v613, %v613
      %v615 = vsel %vm601, %v614, 0.0
      %616 = vadd.xlane.f32.xlu0 %v615
      %v617 = vpop.xlane.xlu0 %616
      %v618 = vrot.slane %v617, 4
      %v619 = vadd.f32 %v617, %v618
      %v620 = vrot.slane %v619, 2
      %v621 = vadd.f32 %v619, %v620
      %v622 = vrot.slane %v621, 1
      %v623 = vadd.f32 %v621, %v622
      %v624 = vmul.f32 %v623, %v611
      %v625 = vadd.f32 %v624, 1e-05
      %v626 = vrsqrt.pop %v625
      %v627 = vmul.f32 %v613, %v626
      %629 = vrot.lane.b32.xlu0 %v428, 107
      %v630 = vpop.permute.xlu0 %629
      %v632 = vmul.f32 %v627, %v630
      %633 = vrot.lane.b32.xlu0 %v428, 101
      %v634 = vpop.permute.xlu0 %633
      %v636 = vadd.f32 %v632, %v634
      %v637 = vld [vmem:[%s2] sm:$0xff]
      %638 = vset.pattern.permute.xlu0 0
      %639 = vperm.xlu0 %638, %v428
      %v640 = vpop.permute.xlu0 %639
      %vm642 = vcmask 64512
      %v644 = vsel %vm642, %v637, 0
      %646 = vmatprep.subr.mxu0 0.0
      %647 = vmatpush1.msra.mxu0 %v426
      %648 = vmatprep.subr.mxu0 0.0
      %649 = vmatpush1.msra.mxu0 0.0
      %650 = vmatprep.subr.mxu0 0.0
      %651 = vmatpush1.msra.mxu0 0.0
      %652 = vmatprep.subr.mxu0 0.0
      %653 = vmatpush1.msra.mxu0 0.0
      %654 = vmatprep.subr.mxu0 0.0
      %655 = vmatpush1.msra.mxu0 0.0
      %656 = vmatprep.subr.mxu0 0.0
      %657 = vmatpush1.msra.mxu0 0.0
      %658 = vmatprep.subr.mxu0 0.0
      %659 = vmatpush1.msra.mxu0 0.0
      %660 = vmatprep.subr.mxu0 0.0
      %661 = vmatpush1.msra.mxu0 0.0
      %662 = vmatprep.subr.mxu0 0.0
      %663 = vmatpush1.msra.mxu0 0.0
      %664 = vmatprep.subr.mxu0 0.0
      %665 = vmatpush1.msra.mxu0 0.0
      %666 = vmatprep.subr.mxu0 0.0
      %667 = vmatpush1.msra.mxu0 0.0
      %668 = vmatprep.subr.mxu0 0.0
      %669 = vmatpush1.msra.mxu0 0.0
      %670 = vmatprep.subr.mxu0 0.0
      %671 = vmatpush1.msra.mxu0 0.0
      %672 = vmatprep.subr.mxu0 0.0
      %673 = vmatpush1.msra.mxu0 0.0
      %674 = vmatprep.subr.mxu0 0.0
      %675 = vmatpush1.msra.mxu0 0.0
      %676 = vmatprep.subr.mxu0 0.0
      %677 = vmatpush1.msra.mxu0 0.0
      %678 = vmatprep.subr.mxu0 0.0
      %679 = vmatpush1.msra.mxu0 0.0
      %680 = vmatprep.subr.mxu0 0.0
      %681 = vmatpush1.msra.mxu0 0.0
      %682 = vmatprep.subr.mxu0 0.0
      %683 = vmatpush1.msra.mxu0 0.0
      %684 = vmatprep.subr.mxu0 0.0
      %685 = vmatpush1.msra.mxu0 0.0
      %686 = vmatprep.subr.mxu0 0.0
      %687 = vmatpush1.msra.mxu0 0.0
      %688 = vmatprep.subr.mxu0 0.0
      %689 = vmatpush1.msra.mxu0 0.0
      %690 = vmatprep.subr.mxu0 0.0
      %691 = vmatpush1.msra.mxu0 0.0
      %692 = vmatprep.subr.mxu0 0.0
      %693 = vmatpush1.msra.mxu0 0.0
      %694 = vmatprep.subr.mxu0 0.0
      %695 = vmatpush1.msra.mxu0 0.0
      %696 = vmatprep.subr.mxu0 0.0
      %697 = vmatpush1.msra.mxu0 0.0
      %698 = vmatprep.subr.mxu0 0.0
      %699 = vmatpush1.msra.mxu0 0.0
      %700 = vmatprep.subr.mxu0 0.0
      %701 = vmatpush1.msra.mxu0 0.0
      %702 = vmatprep.subr.mxu0 0.0
      %703 = vmatpush1.msra.mxu0 0.0
      %704 = vmatprep.subr.mxu0 0.0
      %705 = vmatpush1.msra.mxu0 0.0
      %706 = vmatprep.subr.mxu0 0.0
      %707 = vmatpush1.msra.mxu0 0.0
      %708 = vmatprep.subr.mxu0 0.0
      %709 = vmatpush1.msra.mxu0 0.0
      %710 = vmatprep.mubr.f32.mxu0 0.0
      %711 = vmatmul.mubr.f32.gmra.mrb[0].mxu0 %v644
      %v712 = vpop.f32.mrb[0].mxu0
      %v713 = vadd.f32 %v640, %v712
      %v714 = vpop.f32.mrb[0].mxu0
      %715 = vdwg.mxu0
      %v716 = vmax.f32 %v713, 0.0
      %v717 = vadd.f32 %v426, %v716
      %718 = vmatprep.subr.mxu0 0.0
      %719 = vmatpush1.msra.mxu0 %v636
      %720 = vmatprep.subr.mxu0 0.0
      %721 = vmatpush1.msra.mxu0 0.0
      %722 = vmatprep.subr.mxu0 0.0
      %723 = vmatpush1.msra.mxu0 0.0
      %724 = vmatprep.subr.mxu0 0.0
      %725 = vmatpush1.msra.mxu0 0.0
      %726 = vmatprep.subr.mxu0 0.0
      %727 = vmatpush1.msra.mxu0 0.0
      %728 = vmatprep.subr.mxu0 0.0
      %729 = vmatpush1.msra.mxu0 0.0
      %730 = vmatprep.subr.mxu0 0.0
      %731 = vmatpush1.msra.mxu0 0.0
      %732 = vmatprep.subr.mxu0 0.0
      %733 = vmatpush1.msra.mxu0 0.0
      %734 = vmatprep.subr.mxu0 0.0
      %735 = vmatpush1.msra.mxu0 0.0
      %736 = vmatprep.subr.mxu0 0.0
      %737 = vmatpush1.msra.mxu0 0.0
      %738 = vmatprep.subr.mxu0 0.0
      %739 = vmatpush1.msra.mxu0 0.0
      %740 = vmatprep.subr.mxu0 0.0
      %741 = vmatpush1.msra.mxu0 0.0
      %742 = vmatprep.subr.mxu0 0.0
      %743 = vmatpush1.msra.mxu0 0.0
      %744 = vmatprep.subr.mxu0 0.0
      %745 = vmatpush1.msra.mxu0 0.0
      %746 = vmatprep.subr.mxu0 0.0
      %747 = vmatpush1.msra.mxu0 0.0
      %748 = vmatprep.subr.mxu0 0.0
      %749 = vmatpush1.msra.mxu0 0.0
      %750 = vmatprep.subr.mxu0 0.0
      %751 = vmatpush1.msra.mxu0 0.0
      %752 = vmatprep.subr.mxu0 0.0
      %753 = vmatpush1.msra.mxu0 0.0
      %754 = vmatprep.subr.mxu0 0.0
      %755 = vmatpush1.msra.mxu0 0.0
      %756 = vmatprep.subr.mxu0 0.0
      %757 = vmatpush1.msra.mxu0 0.0
      %758 = vmatprep.subr.mxu0 0.0
      %759 = vmatpush1.msra.mxu0 0.0
      %760 = vmatprep.subr.mxu0 0.0
      %761 = vmatpush1.msra.mxu0 0.0
      %762 = vmatprep.subr.mxu0 0.0
      %763 = vmatpush1.msra.mxu0 0.0
      %764 = vmatprep.subr.mxu0 0.0
      %765 = vmatpush1.msra.mxu0 0.0
      %766 = vmatprep.subr.mxu0 0.0
      %767 = vmatpush1.msra.mxu0 0.0
      %768 = vmatprep.subr.mxu0 0.0
      %769 = vmatpush1.msra.mxu0 0.0
      %770 = vmatprep.subr.mxu0 0.0
      %771 = vmatpush1.msra.mxu0 0.0
      %772 = vmatprep.subr.mxu0 0.0
      %773 = vmatpush1.msra.mxu0 0.0
      %774 = vmatprep.subr.mxu0 0.0
      %775 = vmatpush1.msra.mxu0 0.0
      %776 = vmatprep.subr.mxu0 0.0
      %777 = vmatpush1.msra.mxu0 0.0
      %778 = vmatprep.subr.mxu0 0.0
      %779 = vmatpush1.msra.mxu0 0.0
      %780 = vmatprep.subr.mxu0 0.0
      %781 = vmatpush1.msra.mxu0 0.0
      %782 = vmatprep.mubr.f32.mxu0 0.0
      %783 = vmatmul.mubr.f32.gmra.mrb[0].mxu0 %v644
      %v784 = vpop.f32.mrb[0].mxu0
      %v785 = vadd.f32 %v640, %v784
      %v786 = vpop.f32.mrb[0].mxu0
      %787 = vdwg.mxu0
      %v788 = vmax.f32 %v785, 0.0
      %v789 = vadd.f32 %v636, %v788
      %vm790 = vcmask 31744
      %v791 = vsel %vm790, %v717, 0.0
      %792 = vadd.xlane.f32.xlu0 %v791
      %v793 = vpop.xlane.xlu0 %792
      %v794 = vrot.slane %v793, 4
      %v795 = vadd.f32 %v793, %v794
      %v796 = vrot.slane %v795, 2
      %v797 = vadd.f32 %v795, %v796
      %v798 = vrot.slane %v797, 1
      %v799 = vadd.f32 %v797, %v798
      %v800 = vsel %vm601, %v789, 0.0
      %801 = vadd.xlane.f32.xlu0 %v800
      %v802 = vpop.xlane.xlu0 %801
      %v803 = vrot.slane %v802, 4
      %v804 = vadd.f32 %v802, %v803
      %v805 = vrot.slane %v804, 2
      %v806 = vadd.f32 %v804, %v805
      %v807 = vrot.slane %v806, 1
      %v808 = vadd.f32 %v806, %v807
      %v809 = vadd.f32 %v799, %v808
      %v810 = vrcp.pop 80.0
      %v811 = vmul.f32 %v809, %v810
      %v812 = vsub.f32 %v717, %v811
      %v813 = vsub.f32 %v789, %v811
      %v814 = vmul.f32 %v812, %v812
      %v815 = vsel %vm790, %v814, 0.0
      %816 = vadd.xlane.f32.xlu0 %v815
      %v817 = vpop.xlane.xlu0 %816
      %v818 = vrot.slane %v817, 4
      %v819 = vadd.f32 %v817, %v818
      %v820 = vrot.slane %v819, 2
      %v821 = vadd.f32 %v819, %v820
      %v822 = vrot.slane %v821, 1
      %v823 = vadd.f32 %v821, %v822
      %v824 = vmul.f32 %v813, %v813
      %v825 = vsel %vm601, %v824, 0.0
      %826 = vadd.xlane.f32.xlu0 %v825
      %v827 = vpop.xlane.xlu0 %826
      %v828 = vrot.slane %v827, 4
      %v829 = vadd.f32 %v827, %v828
      %v830 = vrot.slane %v829, 2
      %v831 = vadd.f32 %v829, %v830
      %v832 = vrot.slane %v831, 1
      %v833 = vadd.f32 %v831, %v832
      %v834 = vadd.f32 %v823, %v833
      %v835 = vmul.f32 %v834, %v810
      %v836 = vadd.f32 %v835, 1e-05
      %v837 = vrsqrt.pop %v836
      %v838 = vmul.f32 %v812, %v837
      %839 = vrot.lane.b32.xlu0 %v428, 127
      %v840 = vpop.permute.xlu0 %839
      %v842 = vmul.f32 %v838, %v840
      %843 = vrot.lane.b32.xlu0 %v428, 117
      %v844 = vpop.permute.xlu0 %843
      %v846 = vadd.f32 %v842, %v844
      %v847 = vmul.f32 %v813, %v837
      %848 = vrot.lane.b32.xlu0 %v428, 123
      %v849 = vpop.permute.xlu0 %848
      %v851 = vmul.f32 %v847, %v849
      %852 = vrot.lane.b32.xlu0 %v428, 113
      %v853 = vpop.permute.xlu0 %852
      %v855 = vadd.f32 %v851, %v853
      %v856 = vld [vmem:[%s5] sm:$0xf]
      %v857 = vld [vmem:[%s6] sm:$0x3f]
      %v859 = vsel %vm601, %v855, 0
      %vm861 = vcmask 1045504
      %v863 = vsel %vm861, %v857, 0
      %865 = vmatprep.subr.mxu0 0.0
      %866 = vmatpush1.msra.mxu0 %v863
      %867 = vmatprep.subr.mxu0 0.0
      %868 = vmatpush1.msra.mxu0 0.0
      %869 = vmatprep.subr.mxu0 0.0
      %870 = vmatpush1.msra.mxu0 0.0
      %871 = vmatprep.subr.mxu0 0.0
      %872 = vmatpush1.msra.mxu0 0.0
      %873 = vmatprep.subr.mxu0 0.0
      %874 = vmatpush1.msra.mxu0 0.0
      %875 = vmatprep.subr.mxu0 0.0
      %876 = vmatpush1.msra.mxu0 0.0
      %877 = vmatprep.subr.mxu0 0.0
      %878 = vmatpush1.msra.mxu0 0.0
      %879 = vmatprep.subr.mxu0 0.0
      %880 = vmatpush1.msra.mxu0 0.0
      %881 = vmatprep.subr.mxu0 0.0
      %882 = vmatpush1.msra.mxu0 0.0
      %883 = vmatprep.subr.mxu0 0.0
      %884 = vmatpush1.msra.mxu0 0.0
      %885 = vmatprep.subr.mxu0 0.0
      %886 = vmatpush1.msra.mxu0 0.0
      %887 = vmatprep.subr.mxu0 0.0
      %888 = vmatpush1.msra.mxu0 0.0
      %889 = vmatprep.subr.mxu0 0.0
      %890 = vmatpush1.msra.mxu0 0.0
      %891 = vmatprep.subr.mxu0 0.0
      %892 = vmatpush1.msra.mxu0 0.0
      %893 = vmatprep.subr.mxu0 0.0
      %894 = vmatpush1.msra.mxu0 0.0
      %895 = vmatprep.subr.mxu0 0.0
      %896 = vmatpush1.msra.mxu0 0.0
      %897 = vmatprep.subr.mxu0 0.0
      %898 = vmatpush1.msra.mxu0 0.0
      %899 = vmatprep.subr.mxu0 0.0
      %900 = vmatpush1.msra.mxu0 0.0
      %901 = vmatprep.subr.mxu0 0.0
      %902 = vmatpush1.msra.mxu0 0.0
      %903 = vmatprep.subr.mxu0 0.0
      %904 = vmatpush1.msra.mxu0 0.0
      %905 = vmatprep.subr.mxu0 0.0
      %906 = vmatpush1.msra.mxu0 0.0
      %907 = vmatprep.subr.mxu0 0.0
      %908 = vmatpush1.msra.mxu0 0.0
      %909 = vmatprep.subr.mxu0 0.0
      %910 = vmatpush1.msra.mxu0 0.0
      %911 = vmatprep.subr.mxu0 0.0
      %912 = vmatpush1.msra.mxu0 0.0
      %913 = vmatprep.subr.mxu0 0.0
      %914 = vmatpush1.msra.mxu0 0.0
      %915 = vmatprep.subr.mxu0 0.0
      %916 = vmatpush1.msra.mxu0 0.0
      %917 = vmatprep.subr.mxu0 0.0
      %918 = vmatpush1.msra.mxu0 0.0
      %919 = vmatprep.subr.mxu0 0.0
      %920 = vmatpush1.msra.mxu0 0.0
      %921 = vmatprep.subr.mxu0 0.0
      %922 = vmatpush1.msra.mxu0 0.0
      %923 = vmatprep.subr.mxu0 0.0
      %924 = vmatpush1.msra.mxu0 0.0
      %925 = vmatprep.subr.mxu0 0.0
      %926 = vmatpush1.msra.mxu0 0.0
      %927 = vmatprep.subr.mxu0 0.0
      %928 = vmatpush1.msra.mxu0 0.0
      %929 = vmatprep.mubr.f32.mxu0 0.0
      %930 = vmatmul.mubr.f32.gmra.mrb[0].mxu0 %v859
      %v931 = vpop.f32.mrb[0].mxu0
      %v932 = vadd.f32 0.0, %v931
      %v933 = vpop.f32.mrb[0].mxu0
      %934 = vdwg.mxu0
      %v936 = vsel %vm790, %v846, 0
      %vm938 = vcmask 1043456
      %v940 = vsel %vm938, %v856, 0
      %942 = vmatprep.subr.mxu0 0.0
      %943 = vmatpush1.msra.mxu0 %v940
      %944 = vmatprep.subr.mxu0 0.0
      %945 = vmatpush1.msra.mxu0 0.0
      %946 = vmatprep.subr.mxu0 0.0
      %947 = vmatpush1.msra.mxu0 0.0
      %948 = vmatprep.subr.mxu0 0.0
      %949 = vmatpush1.msra.mxu0 0.0
      %950 = vmatprep.subr.mxu0 0.0
      %951 = vmatpush1.msra.mxu0 0.0
      %952 = vmatprep.subr.mxu0 0.0
      %953 = vmatpush1.msra.mxu0 0.0
      %954 = vmatprep.subr.mxu0 0.0
      %955 = vmatpush1.msra.mxu0 0.0
      %956 = vmatprep.subr.mxu0 0.0
      %957 = vmatpush1.msra.mxu0 0.0
      %958 = vmatprep.subr.mxu0 0.0
      %959 = vmatpush1.msra.mxu0 0.0
      %960 = vmatprep.subr.mxu0 0.0
      %961 = vmatpush1.msra.mxu0 0.0
      %962 = vmatprep.subr.mxu0 0.0
      %963 = vmatpush1.msra.mxu0 0.0
      %964 = vmatprep.subr.mxu0 0.0
      %965 = vmatpush1.msra.mxu0 0.0
      %966 = vmatprep.subr.mxu0 0.0
      %967 = vmatpush1.msra.mxu0 0.0
      %968 = vmatprep.subr.mxu0 0.0
      %969 = vmatpush1.msra.mxu0 0.0
      %970 = vmatprep.subr.mxu0 0.0
      %971 = vmatpush1.msra.mxu0 0.0
      %972 = vmatprep.subr.mxu0 0.0
      %973 = vmatpush1.msra.mxu0 0.0
      %974 = vmatprep.subr.mxu0 0.0
      %975 = vmatpush1.msra.mxu0 0.0
      %976 = vmatprep.subr.mxu0 0.0
      %977 = vmatpush1.msra.mxu0 0.0
      %978 = vmatprep.subr.mxu0 0.0
      %979 = vmatpush1.msra.mxu0 0.0
      %980 = vmatprep.subr.mxu0 0.0
      %981 = vmatpush1.msra.mxu0 0.0
      %982 = vmatprep.subr.mxu0 0.0
      %983 = vmatpush1.msra.mxu0 0.0
      %984 = vmatprep.subr.mxu0 0.0
      %985 = vmatpush1.msra.mxu0 0.0
      %986 = vmatprep.subr.mxu0 0.0
      %987 = vmatpush1.msra.mxu0 0.0
      %988 = vmatprep.subr.mxu0 0.0
      %989 = vmatpush1.msra.mxu0 0.0
      %990 = vmatprep.subr.mxu0 0.0
      %991 = vmatpush1.msra.mxu0 0.0
      %992 = vmatprep.subr.mxu0 0.0
      %993 = vmatpush1.msra.mxu0 0.0
      %994 = vmatprep.subr.mxu0 0.0
      %995 = vmatpush1.msra.mxu0 0.0
      %996 = vmatprep.subr.mxu0 0.0
      %997 = vmatpush1.msra.mxu0 0.0
      %998 = vmatprep.subr.mxu0 0.0
      %999 = vmatpush1.msra.mxu0 0.0
      %1000 = vmatprep.subr.mxu0 0.0
      %1001 = vmatpush1.msra.mxu0 0.0
      %1002 = vmatprep.subr.mxu0 0.0
      %1003 = vmatpush1.msra.mxu0 0.0
      %1004 = vmatprep.subr.mxu0 0.0
      %1005 = vmatpush1.msra.mxu0 0.0
      %1006 = vmatprep.mubr.f32.mxu0 0.0
      %1007 = vmatmul.mubr.f32.gmra.mrb[0].mxu0 %v936
      %v1008 = vpop.f32.mrb[0].mxu0
      %v1009 = vadd.f32 %v932, %v1008
      %v1010 = vpop.f32.mrb[0].mxu0
      %1011 = vdwg.mxu0
      %1012 = vrot.lane.b32.xlu0 %v435, 84
      %v1013 = vpop.permute.xlu0 %1012
      %v1015 = vadd.f32 %v1009, %v1013
      %v1016 = vmax.f32 %v1015, 0.0
      %v1017 = vld [vmem:[%s7] sm:$0xff]
      %v1018 = vld [vmem:[%s7 + $0x8] sm:$0xff]
      %v1019 = vld [vmem:[%s7 + $0x10] sm:$0xff]
      %v1020 = vld [vmem:[%s7 + $0x18] sm:$0xff]
      %1022 = vrot.lane.b32.xlu0 %v1016, 122
      %v1023 = vpop.permute.xlu0 %1022
      %v1024 = vsel %vm523, %v1023, 0
      %1026 = vmatprep.subr.mxu0 0.0
      %1027 = vmatpush1.msra.mxu0 %v1017
      %1028 = vmatprep.subr.mxu0 0.0
      %1029 = vmatpush1.msra.mxu0 %v1018
      %1030 = vmatprep.subr.mxu0 0.0
      %1031 = vmatpush1.msra.mxu0 %v1019
      %1032 = vmatprep.subr.mxu0 0.0
      %1033 = vmatpush1.msra.mxu0 %v1020
      %1034 = vmatprep.subr.mxu0 0.0
      %1035 = vmatpush1.msra.mxu0 0.0
      %1036 = vmatprep.subr.mxu0 0.0
      %1037 = vmatpush1.msra.mxu0 0.0
      %1038 = vmatprep.subr.mxu0 0.0
      %1039 = vmatpush1.msra.mxu0 0.0
      %1040 = vmatprep.subr.mxu0 0.0
      %1041 = vmatpush1.msra.mxu0 0.0
      %1042 = vmatprep.subr.mxu0 0.0
      %1043 = vmatpush1.msra.mxu0 0.0
      %1044 = vmatprep.subr.mxu0 0.0
      %1045 = vmatpush1.msra.mxu0 0.0
      %1046 = vmatprep.subr.mxu0 0.0
      %1047 = vmatpush1.msra.mxu0 0.0
      %1048 = vmatprep.subr.mxu0 0.0
      %1049 = vmatpush1.msra.mxu0 0.0
      %1050 = vmatprep.subr.mxu0 0.0
      %1051 = vmatpush1.msra.mxu0 0.0
      %1052 = vmatprep.subr.mxu0 0.0
      %1053 = vmatpush1.msra.mxu0 0.0
      %1054 = vmatprep.subr.mxu0 0.0
      %1055 = vmatpush1.msra.mxu0 0.0
      %1056 = vmatprep.subr.mxu0 0.0
      %1057 = vmatpush1.msra.mxu0 0.0
      %1058 = vmatprep.subr.mxu0 0.0
      %1059 = vmatpush1.msra.mxu0 0.0
      %1060 = vmatprep.subr.mxu0 0.0
      %1061 = vmatpush1.msra.mxu0 0.0
      %1062 = vmatprep.subr.mxu0 0.0
      %1063 = vmatpush1.msra.mxu0 0.0
      %1064 = vmatprep.subr.mxu0 0.0
      %1065 = vmatpush1.msra.mxu0 0.0
      %1066 = vmatprep.subr.mxu0 0.0
      %1067 = vmatpush1.msra.mxu0 0.0
      %1068 = vmatprep.subr.mxu0 0.0
      %1069 = vmatpush1.msra.mxu0 0.0
      %1070 = vmatprep.subr.mxu0 0.0
      %1071 = vmatpush1.msra.mxu0 0.0
      %1072 = vmatprep.subr.mxu0 0.0
      %1073 = vmatpush1.msra.mxu0 0.0
      %1074 = vmatprep.subr.mxu0 0.0
      %1075 = vmatpush1.msra.mxu0 0.0
      %1076 = vmatprep.subr.mxu0 0.0
      %1077 = vmatpush1.msra.mxu0 0.0
      %1078 = vmatprep.subr.mxu0 0.0
      %1079 = vmatpush1.msra.mxu0 0.0
      %1080 = vmatprep.subr.mxu0 0.0
      %1081 = vmatpush1.msra.mxu0 0.0
      %1082 = vmatprep.subr.mxu0 0.0
      %1083 = vmatpush1.msra.mxu0 0.0
      %1084 = vmatprep.subr.mxu0 0.0
      %1085 = vmatpush1.msra.mxu0 0.0
      %1086 = vmatprep.subr.mxu0 0.0
      %1087 = vmatpush1.msra.mxu0 0.0
      %1088 = vmatprep.subr.mxu0 0.0
      %1089 = vmatpush1.msra.mxu0 0.0
      %1090 = vmatprep.mubr.f32.mxu0 0.0
      %1091 = vmatmul.mubr.f32.gmra.mrb[0].mxu0 %v1024
      %v1092 = vpop.f32.mrb[0].mxu0
      %v1093 = vadd.f32 0.0, %v1092
      %v1094 = vpop.f32.mrb[0].mxu0
      %1095 = vdwg.mxu0
      %v1096 = vadd.f32 %v1015, %v1093
      %1097 = vrot.lane.b32.xlu0 %v435, 46
      %v1098 = vpop.permute.xlu0 %1097
      %v1100 = vadd.f32 %v1096, %v1098
      %v1101 = vld [vmem:[%s10] sm:$0xff]
      %v1102 = vld [vmem:[%s11] sm:$0xff]
      %v1103 = vsel %vm601, %v1100, 0.0
      %1104 = vadd.xlane.f32.xlu0 %v1103
      %v1105 = vpop.xlane.xlu0 %1104
      %v1106 = vrot.slane %v1105, 4
      %v1107 = vadd.f32 %v1105, %v1106
      %v1108 = vrot.slane %v1107, 2
      %v1109 = vadd.f32 %v1107, %v1108
      %v1110 = vrot.slane %v1109, 1
      %v1111 = vadd.f32 %v1109, %v1110
      %v1112 = vmul.f32 %v1111, %v611
      %v1113 = vsub.f32 %v1100, %v1112
      %v1114 = vmul.f32 %v1113, %v1113
      %v1115 = vsel %vm601, %v1114, 0.0
      %1116 = vadd.xlane.f32.xlu0 %v1115
      %v1117 = vpop.xlane.xlu0 %1116
      %v1118 = vrot.slane %v1117, 4
      %v1119 = vadd.f32 %v1117, %v1118
      %v1120 = vrot.slane %v1119, 2
      %v1121 = vadd.f32 %v1119, %v1120
      %v1122 = vrot.slane %v1121, 1
      %v1123 = vadd.f32 %v1121, %v1122
      %v1124 = vmul.f32 %v1123, %v611
      %v1125 = vadd.f32 %v1124, 1e-05
      %v1126 = vrsqrt.pop %v1125
      %v1127 = vmul.f32 %v1113, %v1126
      %v1128 = vmul.f32 %v1127, %v1101
      %v1129 = vadd.f32 %v1128, %v1102
      %1130 = vst.msk [vmem:[%s425] sm:$0xff] %vm601, %v1129
      %p1131 = scmp.lt.s32.totalorder %s23, 1
      %s1132 = scalar_select %p1131, %s23, 1
      %s1133 = smul.addr %s1132, 8
      %s1134 = scalar_lea.vmem %s12, %s1133
      // Predicated region
      $region69: #{tpu_custom_call.1} parent=67 // pred_check
        %p1135 = pneg %p303
      $region70: #{tpu_custom_call.1} parent=67 // pred_check_branch
        %1137 = sbr.rel (%p1135) target = $region72
      $region71: #{tpu_custom_call.1} parent=67 // pred_region
        _
      $region72: #{tpu_custom_call.1} parent=67 // pred_fallthru
        _
    $region68: #{tpu_custom_call.1} parent=5 // pred_fallthru
      _
    %p1138 = scmp.le.s32.totalorder 2, %s18
    // Predicated region
    $region73: #{tpu_custom_call.1} parent=5 // pred_check
      %p1139 = pneg %p1138
    $region74: #{tpu_custom_call.1} parent=5 // pred_check_branch
      %1141 = sbr.rel (%p1139) target = $region76
    $region75: #{tpu_custom_call.1} parent=5 // pred_region
      %s1142 = ssub.s32 %s18, 2
      // Predicated region
      $region77: #{tpu_custom_call.1} parent=75 // pred_check
        %p1143 = pneg %p309
      $region78: #{tpu_custom_call.1} parent=75 // pred_check_branch
        %1145 = sbr.rel (%p1143) target = $region80
      $region79: #{tpu_custom_call.1} parent=75 // pred_region
        %p1146 = scmp.lt.s32.totalorder %s24, 1
        %s1147 = scalar_select %p1146, %s24, 1
        %s1148 = smul.addr %s1147, 8
        %s1149 = scalar_lea.vmem %s12, %s1148
      $region80: #{tpu_custom_call.1} parent=75 // pred_fallthru
        _
    $region76: #{tpu_custom_call.1} parent=5 // pred_fallthru
      _
  $region6: #{tpu_custom_call.1} parent=0 // loop_footer
    %s22 = sadd.s32 1, %s18
  $region7: #{tpu_custom_call.1} parent=0 // loop_footer_branch
    %17 = sbr.rel target = $region3
  $region8: #{tpu_custom_call.1} parent=0 // loop_exit
    _

</llo_original>
